<compile_context>
chip_gen: v5e
topology: v5e:2x2
jax: 0.10.0
libtpu: 0.0.40
codegen_flags: <defaults>
</compile_context>

<pallas_src>
import jax
import jax.numpy as jnp
from jax.experimental import pallas as pl
from jax.experimental.pallas import tpu as pltpu


_MAX_BLOCK_B = 256   # review guidance: BB in the 64-256 range for S~40-64, F~96-128


def attention_kernel(feat_ref, bias_ref, w1_ref, b1_ref, w2_ref, out_ref):
    """One block of BB batch rows.

    feat_ref : (BB, S, F) f32/bf16    bias_ref : (BB, S) f32 (additive mask bias)
    w1_ref   : (F, A)     f32         b1_ref   : (1, A)  f32
    w2_ref   : (1, A)     f32         out_ref  : (BB, F) f32
    """
    BB, S, F = feat_ref.shape

    feat = feat_ref[...]                                    # (BB, S, F)
    feat2d = feat.reshape(BB * S, F)                        # leading-dim merge

    # affine1 + tanh: one (BB*S, F) @ (F, A) bf16 MXU matmul, f32 accumulation,
    # tanh in f32 on the EUP.
    h = jnp.dot(feat2d.astype(jnp.bfloat16),
                w1_ref[...].astype(jnp.bfloat16),
                preferred_element_type=jnp.float32)         # (BB*S, A)
    h = jnp.tanh(h + b1_ref[...])

    # affine2 (no bias) on the VPU: row-dot with the shared w2 row + lane
    # reduction over A, then a tiny relayout to lane-dense (BB, S) scores.
    # (BB independent M=1 MXU matmuls would pay a per-batch RHS reload that
    #  grows linearly with BB.)
    s_col = jnp.sum(h * w2_ref[...], axis=-1, keepdims=True)    # (BB*S, 1)
    scores = s_col.reshape(BB, S) + bias_ref[...]                # additive mask

    # softmax over the sequence (lane) axis, all f32.
    m = jnp.max(scores, axis=-1, keepdims=True)
    e = jnp.exp(scores - m)
    denom = jnp.sum(e, axis=-1, keepdims=True)
    alpha = e * pl.reciprocal(denom, approx=True)                # (BB, S) f32

    # attention pooling on the VPU: per-(b, s) weight broadcast over F, reduce
    # over S.  Keeps the MXU free for affine1 and keeps alpha in f32.
    pooled = jnp.sum(alpha.reshape(BB, S, 1) * feat, axis=1)     # (BB, F) f32
    out_ref[...] = pooled.astype(out_ref.dtype)


def attention_forward(feature, mask, w1, b1, w2, *, block_b=None):
    """feature: (B,S,F); mask: (B,S) of {0,1} or None; w1: (F,A); b1: (A,); w2: (A,1)."""
    B, S, F = feature.shape
    F_w, A = w1.shape
    assert F_w == F, "w1 must have shape (feature_dim, attention_dim)"

    # Tiny host-side tensors only — the big `feature` tensor is passed to the
    # kernel untouched (no pad, no dtype cast); the kernel is memory-bound on
    # the feature read and a host-side pad/cast pass would ~double HBM traffic.
    if mask is None:
        bias = jnp.zeros((B, S), jnp.float32)
    else:
        bias = (jnp.asarray(mask, jnp.float32).reshape(B, S) - 1.0) * jnp.float32(1e9)
    w1_f = jnp.asarray(w1, jnp.float32).reshape(F, A)
    b1_f = jnp.asarray(b1, jnp.float32).reshape(1, A)
    w2_f = jnp.asarray(w2, jnp.float32).reshape(1, A)

    # ---- generation-aware VMEM budget & block size --------------------------
    try:
        vmem_cap = int(pltpu.get_tpu_info().vmem_capacity_bytes)  # 64 MiB/TC (v7x), 128 MiB (v5e/v6e)
    except Exception:
        vmem_cap = 64 * 2**20                                      # safe floor for every generation
    budget = (vmem_cap * 3) // 4         # leave room for compiler-internal scratch
    headroom = 1.25

    fbytes = jnp.dtype(feature.dtype).itemsize
    # Per-batch-row footprint: double-buffered pipeline blocks + in-kernel
    # temporaries (bf16 feature copy, h, lane-padded score-column / alpha-column
    # temporaries, pooling product).
    per_bb = (2 * (S * F * fbytes + S * 4 + F * 4)   # feature / bias / out blocks, x2 buffers
              + S * F * 2                            # feat2d bf16
              + S * A * 8                            # h + h*w2 (f32)
              + 2 * S * 512                          # (BB*S,1) / (BB,S,1) lane-padded temps
              + S * F * 4                            # alpha * feat product
              + 16 * S)                              # scores / alpha / misc
    fixed = 2 * (F * A * 4 + 2 * A * 4)              # resident weights (double-buffered)

    if block_b is None:
        bb_budget = int(max(8, (budget / headroom - fixed) // per_bb))
        if B <= 8:
            block_b = B                              # single full block
        else:
            target_steps = 2 if B < 64 else 4        # keep >=2 (ideally >=4) pipeline steps;
                                                     # v7x shards the parallel batch axis
                                                     # across its two TensorCores
            block_b = min(bb_budget, pl.cdiv(B, target_steps), _MAX_BLOCK_B)
            block_b = max(8, (block_b // 8) * 8)     # sublane-aligned blocks
    BB = int(block_b)
    assert BB == B or BB % 8 == 0, "block_b must be a multiple of 8 (or the full batch)"

    grid = pl.cdiv(B, BB)    # partial last block is fine: rows are independent,
                             # out-of-range output rows are masked on store.

    footprint = fixed + per_bb * BB
    vmem_limit = int(min(budget, max(16 * 2**20, int(footprint * headroom))))

    out = pl.pallas_call(
        attention_kernel,
        out_shape=jax.ShapeDtypeStruct((B, F), jnp.float32),
        grid_spec=pltpu.PrefetchScalarGridSpec(
            num_scalar_prefetch=0,
            grid=(grid,),
            in_specs=[
                # TODO(synk): if xprof still shows exposed DMA after sizing BB,
                # add pipeline_mode=pl.Buffered(3) on this feature spec only.
                pl.BlockSpec((BB, S, F), lambda b: (b, 0, 0)),   # feature (unpadded, original dtype)
                pl.BlockSpec((BB, S), lambda b: (b, 0)),         # additive mask bias
                pl.BlockSpec((F, A), lambda b: (0, 0)),          # W1 (constant index -> DMA'd once)
                pl.BlockSpec((1, A), lambda b: (0, 0)),          # b1
                pl.BlockSpec((1, A), lambda b: (0, 0)),          # w2 (single shared copy)
            ],
            out_specs=pl.BlockSpec((BB, F), lambda b: (b, 0)),
        ),
        compiler_params=pltpu.CompilerParams(
            dimension_semantics=("parallel",),
            vmem_limit_bytes=vmem_limit,
        ),
    )(feature, bias, w1_f, b1_f, w2_f)
    return out


def _xavier_uniform(key, shape, gain=1.0):
    fan_in, fan_out = shape
    limit = gain * (6.0 / (fan_in + fan_out)) ** 0.5
    return jax.random.uniform(key, shape, dtype=jnp.float32, minval=-limit, maxval=limit)


def reference_forward(feature, mask, w1, b1, w2, *, mimic_kernel_casts=False):
    f = jnp.asarray(feature, jnp.float32)
    W1 = jnp.asarray(w1, jnp.float32)
    W2 = jnp.asarray(w2, jnp.float32).reshape(-1)
    f_mm = f
    if mimic_kernel_casts:                       # kernel uses bf16 MXU operands for affine1 only
        f_mm = f.astype(jnp.bfloat16).astype(jnp.float32)
        W1 = W1.astype(jnp.bfloat16).astype(jnp.float32)
    h = jnp.tanh(jnp.einsum("bsf,fa->bsa", f_mm, W1, precision="highest")
                 + jnp.asarray(b1, jnp.float32))
    a = jnp.einsum("bsa,a->bs", h, W2, precision="highest")
    if mask is not None:
        a = jnp.where(mask == 0, -1e9, a)
    alpha = jax.nn.softmax(a, axis=1)
    return jnp.einsum("bs,bsf->bf", alpha, f, precision="highest")


if __name__ == "__main__":
    # Small, deliberately unaligned shapes: exercises the unpadded blocks and
    # the partial (masked) last batch block.
    B, S, F, A = 30, 40, 96, 48   # batch, seq, feature_dim, attention_dim

    key = jax.random.PRNGKey(0)
    k_feat, k_mask, k_w1, k_w2 = jax.random.split(key, 4)

    feature = jax.random.normal(k_feat, (B, S, F), dtype=jnp.float32)
    mask = (jax.random.uniform(k_mask, (B, S)) > 0.3).astype(jnp.float32)
    mask = mask.at[:, 0].set(1.0)   # >= 1 unmasked position per row

    # Parameter init matching the module's initialize() recipe.
    tanh_gain = 5.0 / 3.0                                  # calculate_gain('tanh')
    w1 = _xavier_uniform(k_w1, (F, A), gain=tanh_gain)     # affine1.weight.T
    b1 = jnp.zeros((A,), dtype=jnp.float32)                # affine1.bias
    w2 = _xavier_uniform(k_w2, (A, 1), gain=1.0)           # affine2.weight.T

    out = attention_forward(feature, mask, w1, b1, w2)
    out = jax.block_until_ready(out)

    ref_mimic = reference_forward(feature, mask, w1, b1, w2, mimic_kernel_casts=True)
    ref_f32 = reference_forward(feature, mask, w1, b1, w2)

    assert out.shape == (B, F)
    assert bool(jnp.all(jnp.isfinite(out)))
    assert jnp.allclose(out, ref_mimic, atol=1e-2, rtol=1e-2), "mismatch vs bf16-cast reference"
    assert jnp.allclose(out, ref_f32, atol=5e-2, rtol=5e-2), "mismatch vs f32 reference"

    print("KERNEL_OK")
</pallas_src>

<mosaic_0001>
module attributes {stable_mosaic.version = 11 : i64} {
  func.func @attention_kernel(%arg0: i32, %arg1: memref<8x40x96xf32, #tpu.memory_space<vmem>>, %arg2: memref<8x40xf32, #tpu.memory_space<vmem>>, %arg3: memref<96x48xf32, #tpu.memory_space<vmem>>, %arg4: memref<1x48xf32, #tpu.memory_space<vmem>>, %arg5: memref<1x48xf32, #tpu.memory_space<vmem>>, %arg6: memref<8x96xf32, #tpu.memory_space<vmem>>) attributes {dimension_semantics = [#tpu.dimension_semantics<parallel>], iteration_bounds = array<i64: 4>, scalar_prefetch = 0 : i64, scratch_operands = 0 : i64, tpu.core_type = #tpu.core_type<tc>, window_params = [{transform_indices = @transform_0, window_bounds = array<i64: 8, 40, 96>}, {transform_indices = @transform_1, window_bounds = array<i64: 8, 40>}, {pipeline_mode = #tpu.pipeline_mode<synchronous>, transform_indices = @transform_2, window_bounds = array<i64: 96, 48>}, {pipeline_mode = #tpu.pipeline_mode<synchronous>, transform_indices = @transform_3, window_bounds = array<i64: 1, 48>}, {pipeline_mode = #tpu.pipeline_mode<synchronous>, transform_indices = @transform_4, window_bounds = array<i64: 1, 48>}, {transform_indices = @transform_5, window_bounds = array<i64: 8, 96>}]} {
    %c0 = arith.constant 0 : index
    %c0_0 = arith.constant 0 : index
    %c0_1 = arith.constant 0 : index
    %0 = vector.load %arg1[%c0, %c0_0, %c0_1] : memref<8x40x96xf32, #tpu.memory_space<vmem>>, vector<8x40x96xf32>
    %1 = vector.shape_cast %0 : vector<8x40x96xf32> to vector<320x96xf32>
    %2 = arith.truncf %1 : vector<320x96xf32> to vector<320x96xbf16>
    %c0_2 = arith.constant 0 : index
    %c0_3 = arith.constant 0 : index
    %3 = vector.load %arg3[%c0_2, %c0_3] : memref<96x48xf32, #tpu.memory_space<vmem>>, vector<96x48xf32>
    %4 = arith.truncf %3 : vector<96x48xf32> to vector<96x48xbf16>
    %cst = arith.constant dense<0.000000e+00> : vector<320x48xf32>
    %5 = tpu.matmul %2, %4, %cst {dimension_numbers = #tpu.dot_dimension_numbers<[1], [0], [0], [1], [0, 0, 1, 1], [], []>} : vector<320x96xbf16>, vector<96x48xbf16>, vector<320x48xf32> -> vector<320x48xf32>
    %c0_4 = arith.constant 0 : index
    %c0_5 = arith.constant 0 : index
    %6 = vector.load %arg4[%c0_4, %c0_5] : memref<1x48xf32, #tpu.memory_space<vmem>>, vector<1x48xf32>
    %7 = vector.broadcast %6 : vector<1x48xf32> to vector<320x48xf32>
    %8 = arith.addf %5, %7 : vector<320x48xf32>
    %9 = math.tanh %8 : vector<320x48xf32>
    %c0_6 = arith.constant 0 : index
    %c0_7 = arith.constant 0 : index
    %10 = vector.load %arg5[%c0_6, %c0_7] : memref<1x48xf32, #tpu.memory_space<vmem>>, vector<1x48xf32>
    %11 = vector.broadcast %10 : vector<1x48xf32> to vector<320x48xf32>
    %12 = arith.mulf %9, %11 : vector<320x48xf32>
    %cst_8 = arith.constant dense<0.000000e+00> : vector<320xf32>
    %13 = vector.multi_reduction <add>, %12, %cst_8 [1] : vector<320x48xf32> to vector<320xf32>
    %14 = vector.shape_cast %13 : vector<320xf32> to vector<320x1xf32>
    %15 = vector.shape_cast %14 : vector<320x1xf32> to vector<8x40xf32>
    %c0_9 = arith.constant 0 : index
    %c0_10 = arith.constant 0 : index
    %16 = vector.load %arg2[%c0_9, %c0_10] : memref<8x40xf32, #tpu.memory_space<vmem>>, vector<8x40xf32>
    %17 = arith.addf %15, %16 : vector<8x40xf32>
    %cst_11 = arith.constant dense<0xFF800000> : vector<8xf32>
    %18 = vector.multi_reduction <maximumf>, %17, %cst_11 [1] : vector<8x40xf32> to vector<8xf32>
    %19 = vector.shape_cast %18 : vector<8xf32> to vector<8x1xf32>
    %20 = vector.broadcast %19 : vector<8x1xf32> to vector<8x40xf32>
    %21 = arith.subf %17, %20 : vector<8x40xf32>
    %22 = math.exp %21 : vector<8x40xf32>
    %cst_12 = arith.constant dense<0.000000e+00> : vector<8xf32>
    %23 = vector.multi_reduction <add>, %22, %cst_12 [1] : vector<8x40xf32> to vector<8xf32>
    %24 = vector.shape_cast %23 : vector<8xf32> to vector<8x1xf32>
    %25 = tpu.reciprocal %24 {approx = true} : vector<8x1xf32> -> vector<8x1xf32>
    %26 = vector.broadcast %25 : vector<8x1xf32> to vector<8x40xf32>
    %27 = arith.mulf %22, %26 : vector<8x40xf32>
    %28 = vector.shape_cast %27 : vector<8x40xf32> to vector<8x40x1xf32>
    %29 = vector.broadcast %28 : vector<8x40x1xf32> to vector<8x40x96xf32>
    %30 = arith.mulf %29, %0 : vector<8x40x96xf32>
    %cst_13 = arith.constant dense<0.000000e+00> : vector<8x96xf32>
    %31 = vector.multi_reduction <add>, %30, %cst_13 [1] : vector<8x40x96xf32> to vector<8x96xf32>
    %c0_14 = arith.constant 0 : index
    %c0_15 = arith.constant 0 : index
    %32 = vector.load %arg6[%c0_14, %c0_15] : memref<8x96xf32, #tpu.memory_space<vmem>>, vector<8x96xf32>
    tpu.vector_store %arg6[%c0_14, %c0_15], %31 {strides = array<i32>} : memref<8x96xf32, #tpu.memory_space<vmem>>, vector<8x96xf32>,
    return
  }
  func.func @transform_0(%arg0: i32) -> (i32, i32, i32) {
    %c0_i32 = arith.constant 0 : i32
    %c0_i32_0 = arith.constant 0 : i32
    %c0_i32_1 = arith.constant 0 : i32
    return %arg0, %c0_i32, %c0_i32_0 : i32, i32, i32
  }
  func.func @transform_1(%arg0: i32) -> (i32, i32) {
    %c0_i32 = arith.constant 0 : i32
    %c0_i32_0 = arith.constant 0 : i32
    return %arg0, %c0_i32 : i32, i32
  }
  func.func @transform_2(%arg0: i32) -> (i32, i32) {
    %c0_i32 = arith.constant 0 : i32
    %c0_i32_0 = arith.constant 0 : i32
    %c0_i32_1 = arith.constant 0 : i32
    return %c0_i32, %c0_i32_0 : i32, i32
  }
  func.func @transform_3(%arg0: i32) -> (i32, i32) {
    %c0_i32 = arith.constant 0 : i32
    %c0_i32_0 = arith.constant 0 : i32
    %c0_i32_1 = arith.constant 0 : i32
    return %c0_i32, %c0_i32_0 : i32, i32
  }
  func.func @transform_4(%arg0: i32) -> (i32, i32) {
    %c0_i32 = arith.constant 0 : i32
    %c0_i32_0 = arith.constant 0 : i32
    %c0_i32_1 = arith.constant 0 : i32
    return %c0_i32, %c0_i32_0 : i32, i32
  }
  func.func @transform_5(%arg0: i32) -> (i32, i32) {
    %c0_i32 = arith.constant 0 : i32
    %c0_i32_0 = arith.constant 0 : i32
    return %arg0, %c0_i32 : i32, i32
  }
}

</mosaic_0001>

<llo_original>
// kernel: tpu_custom_call.1
$region0: #{tpu_custom_call.1}
  #allocation0 [shape = 'u32[]', space=smem, size = 0x4, offset = 0x4, fixed_abs, tag = 'smem constant byte address 0x4 - core index']
  #allocation1 [shape = 'u32[72,128]{1,0:T(1,128)}', space=vmem, size = 0x9000, scoped, tag = 'internal scratch']
  %s0 = inlined_call_operand.hbm [shape: f32[30,40,96], index: 0, kind: input, shape index: {}]
  %s1 = inlined_call_operand.vmem [shape: f32[30,40], index: 1, kind: input, shape index: {}]
  %s2 = inlined_call_operand.vmem [shape: f32[96,48], index: 2, kind: input, shape index: {}]
  %s3 = inlined_call_operand.vmem [shape: f32[1,48], index: 3, kind: input, shape index: {}]
  %s4 = inlined_call_operand.vmem [shape: f32[1,48], index: 4, kind: input, shape index: {}]
  %s5 = inlined_call_operand.hbm [shape: f32[30,96], index: 5, kind: output, shape index: {}]
  %s6 = sld [smem:[#allocation0]]
  $region57: #{tpu_custom_call.1} parent=0
    _
  %s8 = ssub.s32 1, %s6
  %s9 = scalar_select 0, %s8, %s6
  $region1: #{tpu_custom_call.1} parent=0
    #allocation2 [shape = 'u8[327680]{0}', space=vmem, size = 0x50000, scoped, tag = 'input window, operand 0']
    #allocation3 [shape = 's32[2]{0}', space=sflag, size = 0x8, scoped, tag = 'scoped memory for tpu_custom_call.1']
    #allocation4 [shape = 's32[2]{0}', space=sflag, size = 0x8, scoped, tag = 'scoped memory for tpu_custom_call.1']
    #allocation5 [shape = 'u8[8192]{0}', space=vmem, size = 0x2000, scoped, tag = 'output window, operand 0']
    %10 = vsyncpa [#allocation3], 0
    %s11 = scalar_lea.sflag [#allocation3], 1
    %12 = vsyncpa %s11, 0
    %13 = vsyncpa [#allocation4], 0
    %s14 = scalar_lea.sflag [#allocation4], 1
    %15 = vsyncpa %s14, 0
    loop: start=0, step=1, limit=6
    $region2: #{tpu_custom_call.1} parent=1 // loop_pre_header
      _
    $region3: #{tpu_custom_call.1} parent=1 // loop_header
      %s17 = sphi 0, %s21
      %p18 = scmp.ge.s32.totalorder %s17, 6
      %s27 = sphi 0, %s29
      %s30 = sphi 0, %s27
      %s31 = sphi 0, %s30
      %s47 = sphi 0, %s31
      %s53 = sphi 0, %s55
      %s56 = sphi 0, %s53
      %s57 = sphi 0, %s56
      %s73 = sphi 0, %s57
      %s77 = sphi 0, %s77
      %s79 = sphi 0, %s77
      %s80 = sphi 0, %s79
      %s94 = sphi 0, %s80
      %s98 = sphi 0, %s98
      %s100 = sphi 0, %s98
      %s101 = sphi 0, %s100
      %s115 = sphi 0, %s101
      %s119 = sphi 0, %s119
      %s121 = sphi 0, %s119
      %s122 = sphi 0, %s121
      %s136 = sphi 0, %s122
      %s142 = sphi 0, %s144
      %s145 = sphi 0, %s142
      %s146 = sphi 0, %s145
      %s162 = sphi 0, %s146
    $region4: #{tpu_custom_call.1} parent=1 // loop_header_branch
      %20 = sbr.rel (%p18) target = $region8
    $region5: #{tpu_custom_call.1} parent=1 // loop_body
      %s22 = ssub.s32 %s17, 1
      %s23 = ssub.s32 %s17, 2
      %s24 = sadd.s32 %s17, 1
      %s25 = ssub.s32 %s17, %s24
      %p26 = scmp.eq.s32.totalorder %s25, 0
      %s28 = sadd.s32 %s27, 1
      %s29 = scalar_select %p26, %s27, %s28
      %p32 = pneg %p26
      %p33 = scmp.eq.s32.totalorder %s17, 3
      %p34 = por %p32, %p33
      %p35 = scmp.ne.s32.totalorder %s27, %s30
      %p36 = scmp.eq.s32.totalorder %s17, 0
      %p37 = por %p35, %p36
      %p38 = scmp.ne.s32.totalorder %s27, %s30
      %p39 = scmp.eq.s32.totalorder %s22, 3
      %p40 = por %p38, %p39
      %p41 = scmp.ne.s32.totalorder %s30, %s31
      %p42 = scmp.eq.s32.totalorder %s22, 0
      %p43 = por %p41, %p42
      %p44 = scmp.ne.s32.totalorder %s30, %s31
      %p45 = scmp.eq.s32.totalorder %s23, 3
      %p46 = por %p44, %p45
      %p48 = scmp.ne.s32.totalorder %s31, %s47
      %p49 = scmp.eq.s32.totalorder %s23, 0
      %p50 = por %p48, %p49
      %s51 = ssub.s32 %s17, %s24
      %p52 = scmp.eq.s32.totalorder %s51, 0
      %s54 = sadd.s32 %s53, 1
      %s55 = scalar_select %p52, %s53, %s54
      %p58 = pneg %p52
      %p59 = scmp.eq.s32.totalorder %s17, 3
      %p60 = por %p58, %p59
      %p61 = scmp.ne.s32.totalorder %s53, %s56
      %p62 = scmp.eq.s32.totalorder %s17, 0
      %p63 = por %p61, %p62
      %p64 = scmp.ne.s32.totalorder %s53, %s56
      %p65 = scmp.eq.s32.totalorder %s22, 3
      %p66 = por %p64, %p65
      %p67 = scmp.ne.s32.totalorder %s56, %s57
      %p68 = scmp.eq.s32.totalorder %s22, 0
      %p69 = por %p67, %p68
      %p70 = scmp.ne.s32.totalorder %s56, %s57
      %p71 = scmp.eq.s32.totalorder %s23, 3
      %p72 = por %p70, %p71
      %p74 = scmp.ne.s32.totalorder %s57, %s73
      %p75 = scmp.eq.s32.totalorder %s23, 0
      %p76 = por %p74, %p75
      %s78 = sadd.s32 %s77, 1
      %p81 = scmp.eq.s32.totalorder %s17, 3
      %p82 = scmp.ne.s32.totalorder %s77, %s79
      %p83 = scmp.eq.s32.totalorder %s17, 0
      %p84 = por %p82, %p83
      %p85 = scmp.ne.s32.totalorder %s77, %s79
      %p86 = scmp.eq.s32.totalorder %s22, 3
      %p87 = por %p85, %p86
      %p88 = scmp.ne.s32.totalorder %s79, %s80
      %p89 = scmp.eq.s32.totalorder %s22, 0
      %p90 = por %p88, %p89
      %p91 = scmp.ne.s32.totalorder %s79, %s80
      %p92 = scmp.eq.s32.totalorder %s23, 3
      %p93 = por %p91, %p92
      %p95 = scmp.ne.s32.totalorder %s80, %s94
      %p96 = scmp.eq.s32.totalorder %s23, 0
      %p97 = por %p95, %p96
      %s99 = sadd.s32 %s98, 1
      %p102 = scmp.eq.s32.totalorder %s17, 3
      %p103 = scmp.ne.s32.totalorder %s98, %s100
      %p104 = scmp.eq.s32.totalorder %s17, 0
      %p105 = por %p103, %p104
      %p106 = scmp.ne.s32.totalorder %s98, %s100
      %p107 = scmp.eq.s32.totalorder %s22, 3
      %p108 = por %p106, %p107
      %p109 = scmp.ne.s32.totalorder %s100, %s101
      %p110 = scmp.eq.s32.totalorder %s22, 0
      %p111 = por %p109, %p110
      %p112 = scmp.ne.s32.totalorder %s100, %s101
      %p113 = scmp.eq.s32.totalorder %s23, 3
      %p114 = por %p112, %p113
      %p116 = scmp.ne.s32.totalorder %s101, %s115
      %p117 = scmp.eq.s32.totalorder %s23, 0
      %p118 = por %p116, %p117
      %s120 = sadd.s32 %s119, 1
      %p123 = scmp.eq.s32.totalorder %s17, 3
      %p124 = scmp.ne.s32.totalorder %s119, %s121
      %p125 = scmp.eq.s32.totalorder %s17, 0
      %p126 = por %p124, %p125
      %p127 = scmp.ne.s32.totalorder %s119, %s121
      %p128 = scmp.eq.s32.totalorder %s22, 3
      %p129 = por %p127, %p128
      %p130 = scmp.ne.s32.totalorder %s121, %s122
      %p131 = scmp.eq.s32.totalorder %s22, 0
      %p132 = por %p130, %p131
      %p133 = scmp.ne.s32.totalorder %s121, %s122
      %p134 = scmp.eq.s32.totalorder %s23, 3
      %p135 = por %p133, %p134
      %p137 = scmp.ne.s32.totalorder %s122, %s136
      %p138 = scmp.eq.s32.totalorder %s23, 0
      %p139 = por %p137, %p138
      %s140 = ssub.s32 %s17, %s24
      %p141 = scmp.eq.s32.totalorder %s140, 0
      %s143 = sadd.s32 %s142, 1
      %s144 = scalar_select %p141, %s142, %s143
      %p147 = pneg %p141
      %p148 = scmp.eq.s32.totalorder %s17, 3
      %p149 = por %p147, %p148
      %p150 = scmp.ne.s32.totalorder %s142, %s145
      %p151 = scmp.eq.s32.totalorder %s17, 0
      %p152 = por %p150, %p151
      %p153 = scmp.ne.s32.totalorder %s142, %s145
      %p154 = scmp.eq.s32.totalorder %s22, 3
      %p155 = por %p153, %p154
      %p156 = scmp.ne.s32.totalorder %s145, %s146
      %p157 = scmp.eq.s32.totalorder %s22, 0
      %p158 = por %p156, %p157
      %p159 = scmp.ne.s32.totalorder %s145, %s146
      %p160 = scmp.eq.s32.totalorder %s23, 3
      %p161 = por %p159, %p160
      %p163 = scmp.ne.s32.totalorder %s146, %s162
      %p164 = scmp.eq.s32.totalorder %s23, 0
      %p165 = por %p163, %p164
      %p166 = scmp.le.s32.totalorder 1, %s17
      %p167 = scmp.lt.s32.totalorder %s17, 5
      %p168 = pnand %p166, %p167
      %p169 = pneg %p168
      // Predicated region
      $region9: #{tpu_custom_call.1} parent=5 // pred_check
        _
      $region10: #{tpu_custom_call.1} parent=5 // pred_check_branch
        %171 = sbr.rel (%p168) target = $region12
      $region11: #{tpu_custom_call.1} parent=5 // pred_region
        %s172 = ssub.s32 %s17, 1
        // Predicated region
        $region13: #{tpu_custom_call.1} parent=11 // pred_check
          %p173 = pneg %p90
        $region14: #{tpu_custom_call.1} parent=11 // pred_check_branch
          %175 = sbr.rel (%p173) target = $region16
        $region15: #{tpu_custom_call.1} parent=11 // pred_region
          _
        $region16: #{tpu_custom_call.1} parent=11 // pred_fallthru
          _
        // Predicated region
        $region17: #{tpu_custom_call.1} parent=11 // pred_check
          %p176 = pneg %p111
        $region18: #{tpu_custom_call.1} parent=11 // pred_check_branch
          %178 = sbr.rel (%p176) target = $region20
        $region19: #{tpu_custom_call.1} parent=11 // pred_region
          _
        $region20: #{tpu_custom_call.1} parent=11 // pred_fallthru
          _
        // Predicated region
        $region21: #{tpu_custom_call.1} parent=11 // pred_check
          %p179 = pneg %p132
        $region22: #{tpu_custom_call.1} parent=11 // pred_check_branch
          %181 = sbr.rel (%p179) target = $region24
        $region23: #{tpu_custom_call.1} parent=11 // pred_region
          _
        $region24: #{tpu_custom_call.1} parent=11 // pred_fallthru
          _
      $region12: #{tpu_custom_call.1} parent=5 // pred_fallthru
        _
      %p182 = scmp.lt.s32.totalorder %s17, 4
      // Predicated region
      $region25: #{tpu_custom_call.1} parent=5 // pred_check
        %p183 = pneg %p182
      $region26: #{tpu_custom_call.1} parent=5 // pred_check_branch
        %185 = sbr.rel (%p183) target = $region28
      $region27: #{tpu_custom_call.1} parent=5 // pred_region
        // Predicated region
        $region29: #{tpu_custom_call.1} parent=27 // pred_check
          %p186 = pneg %p37
        $region30: #{tpu_custom_call.1} parent=27 // pred_check_branch
          %188 = sbr.rel (%p186) target = $region32
        $region31: #{tpu_custom_call.1} parent=27 // pred_region
          %s189 = sand.u32 %s27, 1
          %s190 = scalar_lea.sflag [#allocation3], %s189
          %s191 = sand.u32 %s27, 1
          %s192 = smul.addr %s191, 320
          %s193 = scalar_lea.vmem [#allocation2], %s192
          %s194 = smul.u32 8, %s17
          %s195 = ssub.s32 30, %s194
          %p196 = scmp.lt.s32.totalorder %s195, 8
          %s197 = scalar_select %p196, %s195, 8
          %s198 = smul.u32 8, %s197
          %s199 = smul.u32 %s198, 5
          %s200 = ssub.s32 320, %s199
          %s201 = sshll.u32 %s200, 4
          %202 = vsyncadd %s190, %s201
          %p203 = scmp.ne.s32.totalorder 0, %s199
          %s204 = smul.addr %s194, 5
          %s205 = smul.addr %s204, 8
          %s206 = scalar_lea.hbm %s0, %s205
          %s207 = smul.u32 %s197, 5
          %s208 = smul.u32 8, %s207
          %s209 = sshll.u32 %s206, 4
          %s210 = int_to_ptr.hbm [resolvable:$true] %s209
          %s211 = sshll.u32 %s193, 4
          %s212 = int_to_ptr.vmem [resolvable:$true] %s211
          %s213 = sshll.u32 %s208, 4
          %217 = dma.hbm_to_vmem [thread:$0]  (%p203), %s210, %s213, %s212, %s190, 128, 128, 8
        $region32: #{tpu_custom_call.1} parent=27 // pred_fallthru
          _
        // Predicated region
        $region33: #{tpu_custom_call.1} parent=27 // pred_check
          %p218 = pneg %p63
        $region34: #{tpu_custom_call.1} parent=27 // pred_check_branch
          %220 = sbr.rel (%p218) target = $region36
        $region35: #{tpu_custom_call.1} parent=27 // pred_region
          %p221 = scmp.lt.s32.totalorder %s17, 3
          %s222 = scalar_select %p221, %s17, 3
          %s223 = smul.addr %s222, 8
          %s224 = scalar_lea.vmem %s1, %s223
        $region36: #{tpu_custom_call.1} parent=27 // pred_fallthru
          _
      $region28: #{tpu_custom_call.1} parent=5 // pred_fallthru
        _
      %p225 = scmp.le.s32.totalorder 1, %s17
      %p226 = scmp.lt.s32.totalorder %s17, 5
      %p227 = pnand %p225, %p226
      %p228 = pneg %p227
      // Predicated region
      $region37: #{tpu_custom_call.1} parent=5 // pred_check
        _
      $region38: #{tpu_custom_call.1} parent=5 // pred_check_branch
        %230 = sbr.rel (%p227) target = $region40
      $region39: #{tpu_custom_call.1} parent=5 // pred_region
        %s231 = ssub.s32 %s17, 1
        %s232 = sand.u32 %s30, 1
        %s233 = scalar_lea.sflag [#allocation3], %s232
        %s234 = sand.u32 %s30, 1
        %s235 = smul.addr %s234, 320
        %s236 = scalar_lea.vmem [#allocation2], %s235
        // Predicated region
        $region41: #{tpu_custom_call.1} parent=39 // pred_check
          %p237 = pneg %p43
        $region42: #{tpu_custom_call.1} parent=39 // pred_check_branch
          %239 = sbr.rel (%p237) target = $region44
        $region43: #{tpu_custom_call.1} parent=39 // pred_region
          %241 = dma.done %s233, 5120
        $region44: #{tpu_custom_call.1} parent=39 // pred_fallthru
          _
        %s242 = sand.u32 %s30, 1
        %s243 = scalar_lea.sflag [#allocation3], %s242
        %s244 = sand.u32 %s30, 1
        %s245 = smul.addr %s244, 320
        %s246 = scalar_lea.vmem [#allocation2], %s245
        %p247 = pneg %p43
        %p248 = pneg %p40
        %p249 = scmp.lt.s32.totalorder %s22, 3
        %s250 = scalar_select %p249, %s22, 3
        %s251 = smul.addr %s250, 8
        %s252 = scalar_lea.vmem %s1, %s251
        %p253 = pneg %p69
        %p254 = pneg %p66
        %p255 = pneg %p90
        %p256 = pneg %p87
        %p257 = pneg %p111
        %p258 = pneg %p108
        %p259 = pneg %p132
        %p260 = pneg %p129
        %p261 = pneg %p158
        %p262 = pneg %p155
        %s263 = sand.u32 %s145, 1
        %s264 = scalar_lea.sflag [#allocation4], %s263
        %s265 = sand.u32 %s145, 1
        %s266 = smul.addr %s265, 8
        %s267 = scalar_lea.vmem [#allocation5], %s266
        %s268 = smul.u32 8, %s22
        %s269 = ssub.s32 30, %s268
        %p270 = scmp.lt.s32.totalorder %s269, 8
        %s271 = scalar_select %p270, %s269, 8
        %s272 = smul.u32 8, %s271
        %s273 = smul.u32 %s272, 5
        %p274 = scmp.lt.s32.totalorder %s22, 3
        %s275 = scalar_select %p274, %s22, 3
        %s276 = smul.addr %s275, 8
        %s277 = scalar_lea.vmem %s1, %s276
        %v279 = vld [vmem:[%s236] sm:$0xff]
        %v280 = vld [vmem:[%s236 + $0x8] sm:$0xff]
        %v281 = vld [vmem:[%s236 + $0x10] sm:$0xff]
        %v282 = vld [vmem:[%s236 + $0x18] sm:$0xff]
        %v283 = vld [vmem:[%s236 + $0x20] sm:$0xff]
        %v284 = vld [vmem:[%s236 + $0x28] sm:$0xff]
        %v285 = vld [vmem:[%s236 + $0x30] sm:$0xff]
        %v286 = vld [vmem:[%s236 + $0x38] sm:$0xff]
        %v287 = vld [vmem:[%s236 + $0x40] sm:$0xff]
        %v288 = vld [vmem:[%s236 + $0x48] sm:$0xff]
        %v289 = vld [vmem:[%s236 + $0x50] sm:$0xff]
        %v290 = vld [vmem:[%s236 + $0x58] sm:$0xff]
        %v291 = vld [vmem:[%s236 + $0x60] sm:$0xff]
        %v292 = vld [vmem:[%s236 + $0x68] sm:$0xff]
        %v293 = vld [vmem:[%s236 + $0x70] sm:$0xff]
        %v294 = vld [vmem:[%s236 + $0x78] sm:$0xff]
        %v295 = vld [vmem:[%s236 + $0x80] sm:$0xff]
        %v296 = vld [vmem:[%s236 + $0x88] sm:$0xff]
        %v297 = vld [vmem:[%s236 + $0x90] sm:$0xff]
        %v298 = vld [vmem:[%s236 + $0x98] sm:$0xff]
        %v299 = vld [vmem:[%s236 + $0xa0] sm:$0xff]
        %v300 = vld [vmem:[%s236 + $0xa8] sm:$0xff]
        %v301 = vld [vmem:[%s236 + $0xb0] sm:$0xff]
        %v302 = vld [vmem:[%s236 + $0xb8] sm:$0xff]
        %v303 = vld [vmem:[%s236 + $0xc0] sm:$0xff]
        %v304 = vld [vmem:[%s236 + $0xc8] sm:$0xff]
        %v305 = vld [vmem:[%s236 + $0xd0] sm:$0xff]
        %v306 = vld [vmem:[%s236 + $0xd8] sm:$0xff]
        %v307 = vld [vmem:[%s236 + $0xe0] sm:$0xff]
        %v308 = vld [vmem:[%s236 + $0xe8] sm:$0xff]
        %v309 = vld [vmem:[%s236 + $0xf0] sm:$0xff]
        %v310 = vld [vmem:[%s236 + $0xf8] sm:$0xff]
        %v311 = vld [vmem:[%s236 + $0x100] sm:$0xff]
        %v312 = vld [vmem:[%s236 + $0x108] sm:$0xff]
        %v313 = vld [vmem:[%s236 + $0x110] sm:$0xff]
        %v314 = vld [vmem:[%s236 + $0x118] sm:$0xff]
        %v315 = vld [vmem:[%s236 + $0x120] sm:$0xff]
        %v316 = vld [vmem:[%s236 + $0x128] sm:$0xff]
        %v317 = vld [vmem:[%s236 + $0x130] sm:$0xff]
        %v318 = vld [vmem:[%s236 + $0x138] sm:$0xff]
        %v319 = vpack.c.bf16 %v280, %v279
        %v320 = vpack.c.bf16 %v282, %v281
        %v321 = vpack.c.bf16 %v284, %v283
        %v322 = vpack.c.bf16 %v286, %v285
        %v323 = vpack.c.bf16 %v288, %v287
        %v324 = vpack.c.bf16 %v290, %v289
        %v325 = vpack.c.bf16 %v292, %v291
        %v326 = vpack.c.bf16 %v294, %v293
        %v327 = vpack.c.bf16 %v296, %v295
        %v328 = vpack.c.bf16 %v298, %v297
        %v329 = vpack.c.bf16 %v300, %v299
        %v330 = vpack.c.bf16 %v302, %v301
        %v331 = vpack.c.bf16 %v304, %v303
        %v332 = vpack.c.bf16 %v306, %v305
        %v333 = vpack.c.bf16 %v308, %v307
        %v334 = vpack.c.bf16 %v310, %v309
        %v335 = vpack.c.bf16 %v312, %v311
        %v336 = vpack.c.bf16 %v314, %v313
        %v337 = vpack.c.bf16 %v316, %v315
        %v338 = vpack.c.bf16 %v318, %v317
        %v339 = vld [vmem:[%s2] sm:$0xff]
        %v340 = vld [vmem:[%s2 + $0x8] sm:$0xff]
        %v341 = vld [vmem:[%s2 + $0x10] sm:$0xff]
        %v342 = vld [vmem:[%s2 + $0x18] sm:$0xff]
        %v343 = vld [vmem:[%s2 + $0x20] sm:$0xff]
        %v344 = vld [vmem:[%s2 + $0x28] sm:$0xff]
        %v345 = vld [vmem:[%s2 + $0x30] sm:$0xff]
        %v346 = vld [vmem:[%s2 + $0x38] sm:$0xff]
        %v347 = vld [vmem:[%s2 + $0x40] sm:$0xff]
        %v348 = vld [vmem:[%s2 + $0x48] sm:$0xff]
        %v349 = vld [vmem:[%s2 + $0x50] sm:$0xff]
        %v350 = vld [vmem:[%s2 + $0x58] sm:$0xff]
        %v351 = vpack.c.bf16 %v340, %v339
        %v352 = vpack.c.bf16 %v342, %v341
        %v353 = vpack.c.bf16 %v344, %v343
        %v354 = vpack.c.bf16 %v346, %v345
        %v355 = vpack.c.bf16 %v348, %v347
        %v356 = vpack.c.bf16 %v350, %v349
        %v357 = vld [vmem:[%s3] sm:$0x1]
        %v359 = vperm.slane %v357, 0
        %vm361 = vcmask 785408
        %v363 = vsel %vm361, %v319, 0
        %v366 = vsel %vm361, %v320, 0
        %v369 = vsel %vm361, %v321, 0
        %v372 = vsel %vm361, %v322, 0
        %v375 = vsel %vm361, %v323, 0
        %v378 = vsel %vm361, %v324, 0
        %v381 = vsel %vm361, %v325, 0
        %v384 = vsel %vm361, %v326, 0
        %v387 = vsel %vm361, %v327, 0
        %v390 = vsel %vm361, %v328, 0
        %v393 = vsel %vm361, %v329, 0
        %v396 = vsel %vm361, %v330, 0
        %v399 = vsel %vm361, %v331, 0
        %v402 = vsel %vm361, %v332, 0
        %v405 = vsel %vm361, %v333, 0
        %v408 = vsel %vm361, %v334, 0
        %v411 = vsel %vm361, %v335, 0
        %v414 = vsel %vm361, %v336, 0
        %v417 = vsel %vm361, %v337, 0
        %v420 = vsel %vm361, %v338, 0
        %422 = vmatpush.bf16.msra.mxu0 0
        %423 = vmatpush.bf16.msra.mxu0 0
        %424 = vmatpush.bf16.msra.mxu0 %v356
        %425 = vmatpush.bf16.msra.mxu0 %v355
        %426 = vmatpush.bf16.msra.mxu0 %v354
        %427 = vmatpush.bf16.msra.mxu0 %v353
        %428 = vmatpush.bf16.msra.mxu0 %v352
        %429 = vmatpush.bf16.msra.mxu0 %v351
        %430 = vmatmul.bf16.gmra.mxu0 %v363
        %v431 = vpop.f32.mrf.mxu0
        %v432 = vadd.f32 %v359, %v431
        %v433 = vpop.f32.mrf.mxu0
        %v434 = vadd.f32 %v359, %v433
        %435 = vmatmul.bf16.gmra.mxu0 %v366
        %v436 = vpop.f32.mrf.mxu0
        %v437 = vadd.f32 %v359, %v436
        %v438 = vpop.f32.mrf.mxu0
        %v439 = vadd.f32 %v359, %v438
        %440 = vmatmul.bf16.gmra.mxu0 %v369
        %v441 = vpop.f32.mrf.mxu0
        %v442 = vadd.f32 %v359, %v441
        %v443 = vpop.f32.mrf.mxu0
        %v444 = vadd.f32 %v359, %v443
        %445 = vmatmul.bf16.gmra.mxu0 %v372
        %v446 = vpop.f32.mrf.mxu0
        %v447 = vadd.f32 %v359, %v446
        %v448 = vpop.f32.mrf.mxu0
        %v449 = vadd.f32 %v359, %v448
        %450 = vmatmul.bf16.gmra.mxu0 %v375
        %v451 = vpop.f32.mrf.mxu0
        %v452 = vadd.f32 %v359, %v451
        %v453 = vpop.f32.mrf.mxu0
        %v454 = vadd.f32 %v359, %v453
        %455 = vmatmul.bf16.gmra.mxu0 %v378
        %v456 = vpop.f32.mrf.mxu0
        %v457 = vadd.f32 %v359, %v456
        %v458 = vpop.f32.mrf.mxu0
        %v459 = vadd.f32 %v359, %v458
        %460 = vmatmul.bf16.gmra.mxu0 %v381
        %v461 = vpop.f32.mrf.mxu0
        %v462 = vadd.f32 %v359, %v461
        %v463 = vpop.f32.mrf.mxu0
        %v464 = vadd.f32 %v359, %v463
        %465 = vmatmul.bf16.gmra.mxu0 %v384
        %v466 = vpop.f32.mrf.mxu0
        %v467 = vadd.f32 %v359, %v466
        %v468 = vpop.f32.mrf.mxu0
        %v469 = vadd.f32 %v359, %v468
        %470 = vmatmul.bf16.gmra.mxu0 %v387
        %v471 = vpop.f32.mrf.mxu0
        %v472 = vadd.f32 %v359, %v471
        %v473 = vpop.f32.mrf.mxu0
        %v474 = vadd.f32 %v359, %v473
        %475 = vmatmul.bf16.gmra.mxu0 %v390
        %v476 = vpop.f32.mrf.mxu0
        %v477 = vadd.f32 %v359, %v476
        %v478 = vpop.f32.mrf.mxu0
        %v479 = vadd.f32 %v359, %v478
        %480 = vmatmul.bf16.gmra.mxu0 %v393
        %v481 = vpop.f32.mrf.mxu0
        %v482 = vadd.f32 %v359, %v481
        %v483 = vpop.f32.mrf.mxu0
        %v484 = vadd.f32 %v359, %v483
        %485 = vmatmul.bf16.gmra.mxu0 %v396
        %v486 = vpop.f32.mrf.mxu0
        %v487 = vadd.f32 %v359, %v486
        %v488 = vpop.f32.mrf.mxu0
        %v489 = vadd.f32 %v359, %v488
        %490 = vmatmul.bf16.gmra.mxu0 %v399
        %v491 = vpop.f32.mrf.mxu0
        %v492 = vadd.f32 %v359, %v491
        %v493 = vpop.f32.mrf.mxu0
        %v494 = vadd.f32 %v359, %v493
        %495 = vmatmul.bf16.gmra.mxu0 %v402
        %v496 = vpop.f32.mrf.mxu0
        %v497 = vadd.f32 %v359, %v496
        %v498 = vpop.f32.mrf.mxu0
        %v499 = vadd.f32 %v359, %v498
        %500 = vmatmul.bf16.gmra.mxu0 %v405
        %v501 = vpop.f32.mrf.mxu0
        %v502 = vadd.f32 %v359, %v501
        %v503 = vpop.f32.mrf.mxu0
        %v504 = vadd.f32 %v359, %v503
        %505 = vmatmul.bf16.gmra.mxu0 %v408
        %v506 = vpop.f32.mrf.mxu0
        %v507 = vadd.f32 %v359, %v506
        %v508 = vpop.f32.mrf.mxu0
        %v509 = vadd.f32 %v359, %v508
        %510 = vmatmul.bf16.gmra.mxu0 %v411
        %v511 = vpop.f32.mrf.mxu0
        %v512 = vadd.f32 %v359, %v511
        %v513 = vpop.f32.mrf.mxu0
        %v514 = vadd.f32 %v359, %v513
        %515 = vmatmul.bf16.gmra.mxu0 %v414
        %v516 = vpop.f32.mrf.mxu0
        %v517 = vadd.f32 %v359, %v516
        %v518 = vpop.f32.mrf.mxu0
        %v519 = vadd.f32 %v359, %v518
        %520 = vmatmul.bf16.gmra.mxu0 %v417
        %v521 = vpop.f32.mrf.mxu0
        %v522 = vadd.f32 %v359, %v521
        %v523 = vpop.f32.mrf.mxu0
        %v524 = vadd.f32 %v359, %v523
        %525 = vmatmul.bf16.gmra.mxu0 %v420
        %v526 = vpop.f32.mrf.mxu0
        %v527 = vadd.f32 %v359, %v526
        %v528 = vpop.f32.mrf.mxu0
        %v529 = vadd.f32 %v359, %v528
        %530 = vdwg.mxu0
        %v531 = vtanh.pop %v432
        %v532 = vtanh.pop %v434
        %v533 = vtanh.pop %v437
        %v534 = vtanh.pop %v439
        %v535 = vtanh.pop %v442
        %v536 = vtanh.pop %v444
        %v537 = vtanh.pop %v447
        %v538 = vtanh.pop %v449
        %v539 = vtanh.pop %v452
        %v540 = vtanh.pop %v454
        %v541 = vtanh.pop %v457
        %v542 = vtanh.pop %v459
        %v543 = vtanh.pop %v462
        %v544 = vtanh.pop %v464
        %v545 = vtanh.pop %v467
        %v546 = vtanh.pop %v469
        %v547 = vtanh.pop %v472
        %v548 = vtanh.pop %v474
        %v549 = vtanh.pop %v477
        %v550 = vtanh.pop %v479
        %v551 = vtanh.pop %v482
        %v552 = vtanh.pop %v484
        %v553 = vtanh.pop %v487
        %v554 = vtanh.pop %v489
        %v555 = vtanh.pop %v492
        %v556 = vtanh.pop %v494
        %v557 = vtanh.pop %v497
        %v558 = vtanh.pop %v499
        %v559 = vtanh.pop %v502
        %v560 = vtanh.pop %v504
        %v561 = vtanh.pop %v507
        %v562 = vtanh.pop %v509
        %v563 = vtanh.pop %v512
        %v564 = vtanh.pop %v514
        %v565 = vtanh.pop %v517
        %v566 = vtanh.pop %v519
        %v567 = vtanh.pop %v522
        %v568 = vtanh.pop %v524
        %v569 = vtanh.pop %v527
        %v570 = vtanh.pop %v529
        %v571 = vld [vmem:[%s4] sm:$0x1]
        %v573 = vperm.slane %v571, 0
        %v575 = vmul.f32 %v531, %v573
        %v576 = vmul.f32 %v532, %v573
        %v577 = vmul.f32 %v533, %v573
        %v578 = vmul.f32 %v534, %v573
        %v579 = vmul.f32 %v535, %v573
        %v580 = vmul.f32 %v536, %v573
        %v581 = vmul.f32 %v537, %v573
        %v582 = vmul.f32 %v538, %v573
        %v583 = vmul.f32 %v539, %v573
        %v584 = vmul.f32 %v540, %v573
        %v585 = vmul.f32 %v541, %v573
        %v586 = vmul.f32 %v542, %v573
        %v587 = vmul.f32 %v543, %v573
        %v588 = vmul.f32 %v544, %v573
        %v589 = vmul.f32 %v545, %v573
        %v590 = vmul.f32 %v546, %v573
        %v591 = vmul.f32 %v547, %v573
        %v592 = vmul.f32 %v548, %v573
        %v593 = vmul.f32 %v549, %v573
        %v594 = vmul.f32 %v550, %v573
        %v595 = vmul.f32 %v551, %v573
        %v596 = vmul.f32 %v552, %v573
        %v597 = vmul.f32 %v553, %v573
        %v598 = vmul.f32 %v554, %v573
        %v599 = vmul.f32 %v555, %v573
        %v600 = vmul.f32 %v556, %v573
        %v601 = vmul.f32 %v557, %v573
        %v602 = vmul.f32 %v558, %v573
        %v603 = vmul.f32 %v559, %v573
        %v604 = vmul.f32 %v560, %v573
        %v605 = vmul.f32 %v561, %v573
        %v606 = vmul.f32 %v562, %v573
        %v607 = vmul.f32 %v563, %v573
        %v608 = vmul.f32 %v564, %v573
        %v609 = vmul.f32 %v565, %v573
        %v610 = vmul.f32 %v566, %v573
        %v611 = vmul.f32 %v567, %v573
        %v612 = vmul.f32 %v568, %v573
        %v613 = vmul.f32 %v569, %v573
        %v614 = vmul.f32 %v570, %v573
        %vm615 = vcmask 392192
        %v616 = vsel %vm615, %v575, 0.0
        %617 = vadd.xlane.f32.xlu0 %v616
        %v618 = vpop.xlane.xlu0 %617
        %v619 = vsel %vm615, %v576, 0.0
        %620 = vadd.xlane.f32.xlu0 %v619
        %v621 = vpop.xlane.xlu0 %620
        %v622 = vsel %vm615, %v577, 0.0
        %623 = vadd.xlane.f32.xlu0 %v622
        %v624 = vpop.xlane.xlu0 %623
        %v625 = vsel %vm615, %v578, 0.0
        %626 = vadd.xlane.f32.xlu0 %v625
        %v627 = vpop.xlane.xlu0 %626
        %v628 = vsel %vm615, %v579, 0.0
        %629 = vadd.xlane.f32.xlu0 %v628
        %v630 = vpop.xlane.xlu0 %629
        %v631 = vsel %vm615, %v580, 0.0
        %632 = vadd.xlane.f32.xlu0 %v631
        %v633 = vpop.xlane.xlu0 %632
        %v634 = vsel %vm615, %v581, 0.0
        %635 = vadd.xlane.f32.xlu0 %v634
        %v636 = vpop.xlane.xlu0 %635
        %v637 = vsel %vm615, %v582, 0.0
        %638 = vadd.xlane.f32.xlu0 %v637
        %v639 = vpop.xlane.xlu0 %638
        %v640 = vsel %vm615, %v583, 0.0
        %641 = vadd.xlane.f32.xlu0 %v640
        %v642 = vpop.xlane.xlu0 %641
        %v643 = vsel %vm615, %v584, 0.0
        %644 = vadd.xlane.f32.xlu0 %v643
        %v645 = vpop.xlane.xlu0 %644
        %v646 = vsel %vm615, %v585, 0.0
        %647 = vadd.xlane.f32.xlu0 %v646
        %v648 = vpop.xlane.xlu0 %647
        %v649 = vsel %vm615, %v586, 0.0
        %650 = vadd.xlane.f32.xlu0 %v649
        %v651 = vpop.xlane.xlu0 %650
        %v652 = vsel %vm615, %v587, 0.0
        %653 = vadd.xlane.f32.xlu0 %v652
        %v654 = vpop.xlane.xlu0 %653
        %v655 = vsel %vm615, %v588, 0.0
        %656 = vadd.xlane.f32.xlu0 %v655
        %v657 = vpop.xlane.xlu0 %656
        %v658 = vsel %vm615, %v589, 0.0
        %659 = vadd.xlane.f32.xlu0 %v658
        %v660 = vpop.xlane.xlu0 %659
        %v661 = vsel %vm615, %v590, 0.0
        %662 = vadd.xlane.f32.xlu0 %v661
        %v663 = vpop.xlane.xlu0 %662
        %v664 = vsel %vm615, %v591, 0.0
        %665 = vadd.xlane.f32.xlu0 %v664
        %v666 = vpop.xlane.xlu0 %665
        %v667 = vsel %vm615, %v592, 0.0
        %668 = vadd.xlane.f32.xlu0 %v667
        %v669 = vpop.xlane.xlu0 %668
        %v670 = vsel %vm615, %v593, 0.0
        %671 = vadd.xlane.f32.xlu0 %v670
        %v672 = vpop.xlane.xlu0 %671
        %v673 = vsel %vm615, %v594, 0.0
        %674 = vadd.xlane.f32.xlu0 %v673
        %v675 = vpop.xlane.xlu0 %674
        %v676 = vsel %vm615, %v595, 0.0
        %677 = vadd.xlane.f32.xlu0 %v676
        %v678 = vpop.xlane.xlu0 %677
        %v679 = vsel %vm615, %v596, 0.0
        %680 = vadd.xlane.f32.xlu0 %v679
        %v681 = vpop.xlane.xlu0 %680
        %v682 = vsel %vm615, %v597, 0.0
        %683 = vadd.xlane.f32.xlu0 %v682
        %v684 = vpop.xlane.xlu0 %683
        %v685 = vsel %vm615, %v598, 0.0
        %686 = vadd.xlane.f32.xlu0 %v685
        %v687 = vpop.xlane.xlu0 %686
        %v688 = vsel %vm615, %v599, 0.0
        %689 = vadd.xlane.f32.xlu0 %v688
        %v690 = vpop.xlane.xlu0 %689
        %v691 = vsel %vm615, %v600, 0.0
        %692 = vadd.xlane.f32.xlu0 %v691
        %v693 = vpop.xlane.xlu0 %692
        %v694 = vsel %vm615, %v601, 0.0
        %695 = vadd.xlane.f32.xlu0 %v694
        %v696 = vpop.xlane.xlu0 %695
        %v697 = vsel %vm615, %v602, 0.0
        %698 = vadd.xlane.f32.xlu0 %v697
        %v699 = vpop.xlane.xlu0 %698
        %v700 = vsel %vm615, %v603, 0.0
        %701 = vadd.xlane.f32.xlu0 %v700
        %v702 = vpop.xlane.xlu0 %701
        %v703 = vsel %vm615, %v604, 0.0
        %704 = vadd.xlane.f32.xlu0 %v703
        %v705 = vpop.xlane.xlu0 %704
        %v706 = vsel %vm615, %v605, 0.0
        %707 = vadd.xlane.f32.xlu0 %v706
        %v708 = vpop.xlane.xlu0 %707
        %v709 = vsel %vm615, %v606, 0.0
        %710 = vadd.xlane.f32.xlu0 %v709
        %v711 = vpop.xlane.xlu0 %710
        %v712 = vsel %vm615, %v607, 0.0
        %713 = vadd.xlane.f32.xlu0 %v712
        %v714 = vpop.xlane.xlu0 %713
        %v715 = vsel %vm615, %v608, 0.0
        %716 = vadd.xlane.f32.xlu0 %v715
        %v717 = vpop.xlane.xlu0 %716
        %v718 = vsel %vm615, %v609, 0.0
        %719 = vadd.xlane.f32.xlu0 %v718
        %v720 = vpop.xlane.xlu0 %719
        %v721 = vsel %vm615, %v610, 0.0
        %722 = vadd.xlane.f32.xlu0 %v721
        %v723 = vpop.xlane.xlu0 %722
        %v724 = vsel %vm615, %v611, 0.0
        %725 = vadd.xlane.f32.xlu0 %v724
        %v726 = vpop.xlane.xlu0 %725
        %v727 = vsel %vm615, %v612, 0.0
        %728 = vadd.xlane.f32.xlu0 %v727
        %v729 = vpop.xlane.xlu0 %728
        %v730 = vsel %vm615, %v613, 0.0
        %731 = vadd.xlane.f32.xlu0 %v730
        %v732 = vpop.xlane.xlu0 %731
        %v733 = vsel %vm615, %v614, 0.0
        %734 = vadd.xlane.f32.xlu0 %v733
        %v735 = vpop.xlane.xlu0 %734
        %v736 = vld [vmem:[%s277] sm:$0xff]
        %v738 = vperm.slane %v736, 0
        %v739 = vlaneseq
        %v740 = vshrl.u32 %v739, 7
        %742 = vset.pattern.permute.xlu0 %v740
        %743 = vperm.xlu0 %742, %v738
        %v744 = vpop.permute.xlu0 %743
        %v745 = vlaneseq
        %v746 = vshrl.u32 %v745, 7
        %v747 = vadd.s32 %v746, 8
        %748 = vset.pattern.permute.xlu0 %v747
        %749 = vperm.xlu0 %748, %v738
        %v750 = vpop.permute.xlu0 %749
        %v751 = vlaneseq
        %v752 = vshrl.u32 %v751, 7
        %v753 = vadd.s32 %v752, 16
        %754 = vset.pattern.permute.xlu0 %v753
        %755 = vperm.xlu0 %754, %v738
        %v756 = vpop.permute.xlu0 %755
        %v757 = vlaneseq
        %v758 = vshrl.u32 %v757, 7
        %v759 = vadd.s32 %v758, 24
        %760 = vset.pattern.permute.xlu0 %v759
        %761 = vperm.xlu0 %760, %v738
        %v762 = vpop.permute.xlu0 %761
        %v763 = vlaneseq
        %v764 = vshrl.u32 %v763, 7
        %v765 = vadd.s32 %v764, 32
        %766 = vset.pattern.permute.xlu0 %v765
        %767 = vperm.xlu0 %766, %v738
        %v768 = vpop.permute.xlu0 %767
        %v769 = vperm.slane %v736, 1
        %v770 = vlaneseq
        %v771 = vshrl.u32 %v770, 7
        %773 = vset.pattern.permute.xlu0 %v771
        %774 = vperm.xlu0 %773, %v769
        %v775 = vpop.permute.xlu0 %774
        %v776 = vlaneseq
        %v777 = vshrl.u32 %v776, 7
        %v778 = vadd.s32 %v777, 8
        %779 = vset.pattern.permute.xlu0 %v778
        %780 = vperm.xlu0 %779, %v769
        %v781 = vpop.permute.xlu0 %780
        %v782 = vlaneseq
        %v783 = vshrl.u32 %v782, 7
        %v784 = vadd.s32 %v783, 16
        %785 = vset.pattern.permute.xlu0 %v784
        %786 = vperm.xlu0 %785, %v769
        %v787 = vpop.permute.xlu0 %786
        %v788 = vlaneseq
        %v789 = vshrl.u32 %v788, 7
        %v790 = vadd.s32 %v789, 24
        %791 = vset.pattern.permute.xlu0 %v790
        %792 = vperm.xlu0 %791, %v769
        %v793 = vpop.permute.xlu0 %792
        %v794 = vlaneseq
        %v795 = vshrl.u32 %v794, 7
        %v796 = vadd.s32 %v795, 32
        %797 = vset.pattern.permute.xlu0 %v796
        %798 = vperm.xlu0 %797, %v769
        %v799 = vpop.permute.xlu0 %798
        %v800 = vperm.slane %v736, 2
        %v801 = vlaneseq
        %v802 = vshrl.u32 %v801, 7
        %804 = vset.pattern.permute.xlu0 %v802
        %805 = vperm.xlu0 %804, %v800
        %v806 = vpop.permute.xlu0 %805
        %v807 = vlaneseq
        %v808 = vshrl.u32 %v807, 7
        %v809 = vadd.s32 %v808, 8
        %810 = vset.pattern.permute.xlu0 %v809
        %811 = vperm.xlu0 %810, %v800
        %v812 = vpop.permute.xlu0 %811
        %v813 = vlaneseq
        %v814 = vshrl.u32 %v813, 7
        %v815 = vadd.s32 %v814, 16
        %816 = vset.pattern.permute.xlu0 %v815
        %817 = vperm.xlu0 %816, %v800
        %v818 = vpop.permute.xlu0 %817
        %v819 = vlaneseq
        %v820 = vshrl.u32 %v819, 7
        %v821 = vadd.s32 %v820, 24
        %822 = vset.pattern.permute.xlu0 %v821
        %823 = vperm.xlu0 %822, %v800
        %v824 = vpop.permute.xlu0 %823
        %v825 = vlaneseq
        %v826 = vshrl.u32 %v825, 7
        %v827 = vadd.s32 %v826, 32
        %828 = vset.pattern.permute.xlu0 %v827
        %829 = vperm.xlu0 %828, %v800
        %v830 = vpop.permute.xlu0 %829
        %v831 = vperm.slane %v736, 3
        %v832 = vlaneseq
        %v833 = vshrl.u32 %v832, 7
        %835 = vset.pattern.permute.xlu0 %v833
        %836 = vperm.xlu0 %835, %v831
        %v837 = vpop.permute.xlu0 %836
        %v838 = vlaneseq
        %v839 = vshrl.u32 %v838, 7
        %v840 = vadd.s32 %v839, 8
        %841 = vset.pattern.permute.xlu0 %v840
        %842 = vperm.xlu0 %841, %v831
        %v843 = vpop.permute.xlu0 %842
        %v844 = vlaneseq
        %v845 = vshrl.u32 %v844, 7
        %v846 = vadd.s32 %v845, 16
        %847 = vset.pattern.permute.xlu0 %v846
        %848 = vperm.xlu0 %847, %v831
        %v849 = vpop.permute.xlu0 %848
        %v850 = vlaneseq
        %v851 = vshrl.u32 %v850, 7
        %v852 = vadd.s32 %v851, 24
        %853 = vset.pattern.permute.xlu0 %v852
        %854 = vperm.xlu0 %853, %v831
        %v855 = vpop.permute.xlu0 %854
        %v856 = vlaneseq
        %v857 = vshrl.u32 %v856, 7
        %v858 = vadd.s32 %v857, 32
        %859 = vset.pattern.permute.xlu0 %v858
        %860 = vperm.xlu0 %859, %v831
        %v861 = vpop.permute.xlu0 %860
        %v862 = vperm.slane %v736, 4
        %v863 = vlaneseq
        %v864 = vshrl.u32 %v863, 7
        %866 = vset.pattern.permute.xlu0 %v864
        %867 = vperm.xlu0 %866, %v862
        %v868 = vpop.permute.xlu0 %867
        %v869 = vlaneseq
        %v870 = vshrl.u32 %v869, 7
        %v871 = vadd.s32 %v870, 8
        %872 = vset.pattern.permute.xlu0 %v871
        %873 = vperm.xlu0 %872, %v862
        %v874 = vpop.permute.xlu0 %873
        %v875 = vlaneseq
        %v876 = vshrl.u32 %v875, 7
        %v877 = vadd.s32 %v876, 16
        %878 = vset.pattern.permute.xlu0 %v877
        %879 = vperm.xlu0 %878, %v862
        %v880 = vpop.permute.xlu0 %879
        %v881 = vlaneseq
        %v882 = vshrl.u32 %v881, 7
        %v883 = vadd.s32 %v882, 24
        %884 = vset.pattern.permute.xlu0 %v883
        %885 = vperm.xlu0 %884, %v862
        %v886 = vpop.permute.xlu0 %885
        %v887 = vlaneseq
        %v888 = vshrl.u32 %v887, 7
        %v889 = vadd.s32 %v888, 32
        %890 = vset.pattern.permute.xlu0 %v889
        %891 = vperm.xlu0 %890, %v862
        %v892 = vpop.permute.xlu0 %891
        %v893 = vperm.slane %v736, 5
        %v894 = vlaneseq
        %v895 = vshrl.u32 %v894, 7
        %897 = vset.pattern.permute.xlu0 %v895
        %898 = vperm.xlu0 %897, %v893
        %v899 = vpop.permute.xlu0 %898
        %v900 = vlaneseq
        %v901 = vshrl.u32 %v900, 7
        %v902 = vadd.s32 %v901, 8
        %903 = vset.pattern.permute.xlu0 %v902
        %904 = vperm.xlu0 %903, %v893
        %v905 = vpop.permute.xlu0 %904
        %v906 = vlaneseq
        %v907 = vshrl.u32 %v906, 7
        %v908 = vadd.s32 %v907, 16
        %909 = vset.pattern.permute.xlu0 %v908
        %910 = vperm.xlu0 %909, %v893
        %v911 = vpop.permute.xlu0 %910
        %v912 = vlaneseq
        %v913 = vshrl.u32 %v912, 7
        %v914 = vadd.s32 %v913, 24
        %915 = vset.pattern.permute.xlu0 %v914
        %916 = vperm.xlu0 %915, %v893
        %v917 = vpop.permute.xlu0 %916
        %v918 = vlaneseq
        %v919 = vshrl.u32 %v918, 7
        %v920 = vadd.s32 %v919, 32
        %921 = vset.pattern.permute.xlu0 %v920
        %922 = vperm.xlu0 %921, %v893
        %v923 = vpop.permute.xlu0 %922
        %v924 = vperm.slane %v736, 6
        %v925 = vlaneseq
        %v926 = vshrl.u32 %v925, 7
        %928 = vset.pattern.permute.xlu0 %v926
        %929 = vperm.xlu0 %928, %v924
        %v930 = vpop.permute.xlu0 %929
        %v931 = vlaneseq
        %v932 = vshrl.u32 %v931, 7
        %v933 = vadd.s32 %v932, 8
        %934 = vset.pattern.permute.xlu0 %v933
        %935 = vperm.xlu0 %934, %v924
        %v936 = vpop.permute.xlu0 %935
        %v937 = vlaneseq
        %v938 = vshrl.u32 %v937, 7
        %v939 = vadd.s32 %v938, 16
        %940 = vset.pattern.permute.xlu0 %v939
        %941 = vperm.xlu0 %940, %v924
        %v942 = vpop.permute.xlu0 %941
        %v943 = vlaneseq
        %v944 = vshrl.u32 %v943, 7
        %v945 = vadd.s32 %v944, 24
        %946 = vset.pattern.permute.xlu0 %v945
        %947 = vperm.xlu0 %946, %v924
        %v948 = vpop.permute.xlu0 %947
        %v949 = vlaneseq
        %v950 = vshrl.u32 %v949, 7
        %v951 = vadd.s32 %v950, 32
        %952 = vset.pattern.permute.xlu0 %v951
        %953 = vperm.xlu0 %952, %v924
        %v954 = vpop.permute.xlu0 %953
        %v955 = vperm.slane %v736, 7
        %v956 = vlaneseq
        %v957 = vshrl.u32 %v956, 7
        %959 = vset.pattern.permute.xlu0 %v957
        %960 = vperm.xlu0 %959, %v955
        %v961 = vpop.permute.xlu0 %960
        %v962 = vlaneseq
        %v963 = vshrl.u32 %v962, 7
        %v964 = vadd.s32 %v963, 8
        %965 = vset.pattern.permute.xlu0 %v964
        %966 = vperm.xlu0 %965, %v955
        %v967 = vpop.permute.xlu0 %966
        %v968 = vlaneseq
        %v969 = vshrl.u32 %v968, 7
        %v970 = vadd.s32 %v969, 16
        %971 = vset.pattern.permute.xlu0 %v970
        %972 = vperm.xlu0 %971, %v955
        %v973 = vpop.permute.xlu0 %972
        %v974 = vlaneseq
        %v975 = vshrl.u32 %v974, 7
        %v976 = vadd.s32 %v975, 24
        %977 = vset.pattern.permute.xlu0 %v976
        %978 = vperm.xlu0 %977, %v955
        %v979 = vpop.permute.xlu0 %978
        %v980 = vlaneseq
        %v981 = vshrl.u32 %v980, 7
        %v982 = vadd.s32 %v981, 32
        %983 = vset.pattern.permute.xlu0 %v982
        %984 = vperm.xlu0 %983, %v955
        %v985 = vpop.permute.xlu0 %984
        %v1026 = vadd.f32 %v618, %v744
        %v1027 = vadd.f32 %v621, %v750
        %v1028 = vadd.f32 %v624, %v756
        %v1029 = vadd.f32 %v627, %v762
        %v1030 = vadd.f32 %v630, %v768
        %v1031 = vadd.f32 %v633, %v775
        %v1032 = vadd.f32 %v636, %v781
        %v1033 = vadd.f32 %v639, %v787
        %v1034 = vadd.f32 %v642, %v793
        %v1035 = vadd.f32 %v645, %v799
        %v1036 = vadd.f32 %v648, %v806
        %v1037 = vadd.f32 %v651, %v812
        %v1038 = vadd.f32 %v654, %v818
        %v1039 = vadd.f32 %v657, %v824
        %v1040 = vadd.f32 %v660, %v830
        %v1041 = vadd.f32 %v663, %v837
        %v1042 = vadd.f32 %v666, %v843
        %v1043 = vadd.f32 %v669, %v849
        %v1044 = vadd.f32 %v672, %v855
        %v1045 = vadd.f32 %v675, %v861
        %v1046 = vadd.f32 %v678, %v868
        %v1047 = vadd.f32 %v681, %v874
        %v1048 = vadd.f32 %v684, %v880
        %v1049 = vadd.f32 %v687, %v886
        %v1050 = vadd.f32 %v690, %v892
        %v1051 = vadd.f32 %v693, %v899
        %v1052 = vadd.f32 %v696, %v905
        %v1053 = vadd.f32 %v699, %v911
        %v1054 = vadd.f32 %v702, %v917
        %v1055 = vadd.f32 %v705, %v923
        %v1056 = vadd.f32 %v708, %v930
        %v1057 = vadd.f32 %v711, %v936
        %v1058 = vadd.f32 %v714, %v942
        %v1059 = vadd.f32 %v717, %v948
        %v1060 = vadd.f32 %v720, %v954
        %v1061 = vadd.f32 %v723, %v961
        %v1062 = vadd.f32 %v726, %v967
        %v1063 = vadd.f32 %v729, %v973
        %v1064 = vadd.f32 %v732, %v979
        %v1065 = vadd.f32 %v735, %v985
        %1106 = vset.pattern.permute.xlu0 0
        %1107 = vperm.xlu0 %1106, %v1026
        %v1108 = vpop.permute.xlu0 %1107
        %1109 = vset.pattern.permute.xlu0 0
        %1110 = vperm.xlu0 %1109, %v1027
        %v1111 = vpop.permute.xlu0 %1110
        %1112 = vset.pattern.permute.xlu0 0
        %1113 = vperm.xlu0 %1112, %v1028
        %v1114 = vpop.permute.xlu0 %1113
        %1115 = vset.pattern.permute.xlu0 0
        %1116 = vperm.xlu0 %1115, %v1029
        %v1117 = vpop.permute.xlu0 %1116
        %1118 = vset.pattern.permute.xlu0 0
        %1119 = vperm.xlu0 %1118, %v1030
        %v1120 = vpop.permute.xlu0 %1119
        %1121 = vset.pattern.permute.xlu0 0
        %1122 = vperm.xlu0 %1121, %v1031
        %v1123 = vpop.permute.xlu0 %1122
        %1124 = vset.pattern.permute.xlu0 0
        %1125 = vperm.xlu0 %1124, %v1032
        %v1126 = vpop.permute.xlu0 %1125
        %1127 = vset.pattern.permute.xlu0 0
        %1128 = vperm.xlu0 %1127, %v1033
        %v1129 = vpop.permute.xlu0 %1128
        %1130 = vset.pattern.permute.xlu0 0
        %1131 = vperm.xlu0 %1130, %v1034
        %v1132 = vpop.permute.xlu0 %1131
        %1133 = vset.pattern.permute.xlu0 0
        %1134 = vperm.xlu0 %1133, %v1035
        %v1135 = vpop.permute.xlu0 %1134
        %1136 = vset.pattern.permute.xlu0 0
        %1137 = vperm.xlu0 %1136, %v1036
        %v1138 = vpop.permute.xlu0 %1137
        %1139 = vset.pattern.permute.xlu0 0
        %1140 = vperm.xlu0 %1139, %v1037
        %v1141 = vpop.permute.xlu0 %1140
        %1142 = vset.pattern.permute.xlu0 0
        %1143 = vperm.xlu0 %1142, %v1038
        %v1144 = vpop.permute.xlu0 %1143
        %1145 = vset.pattern.permute.xlu0 0
        %1146 = vperm.xlu0 %1145, %v1039
        %v1147 = vpop.permute.xlu0 %1146
        %1148 = vset.pattern.permute.xlu0 0
        %1149 = vperm.xlu0 %1148, %v1040
        %v1150 = vpop.permute.xlu0 %1149
        %1151 = vset.pattern.permute.xlu0 0
        %1152 = vperm.xlu0 %1151, %v1041
        %v1153 = vpop.permute.xlu0 %1152
        %1154 = vset.pattern.permute.xlu0 0
        %1155 = vperm.xlu0 %1154, %v1042
        %v1156 = vpop.permute.xlu0 %1155
        %1157 = vset.pattern.permute.xlu0 0
        %1158 = vperm.xlu0 %1157, %v1043
        %v1159 = vpop.permute.xlu0 %1158
        %1160 = vset.pattern.permute.xlu0 0
        %1161 = vperm.xlu0 %1160, %v1044
        %v1162 = vpop.permute.xlu0 %1161
        %1163 = vset.pattern.permute.xlu0 0
        %1164 = vperm.xlu0 %1163, %v1045
        %v1165 = vpop.permute.xlu0 %1164
        %1166 = vset.pattern.permute.xlu0 0
        %1167 = vperm.xlu0 %1166, %v1046
        %v1168 = vpop.permute.xlu0 %1167
        %1169 = vset.pattern.permute.xlu0 0
        %1170 = vperm.xlu0 %1169, %v1047
        %v1171 = vpop.permute.xlu0 %1170
        %1172 = vset.pattern.permute.xlu0 0
        %1173 = vperm.xlu0 %1172, %v1048
        %v1174 = vpop.permute.xlu0 %1173
        %1175 = vset.pattern.permute.xlu0 0
        %1176 = vperm.xlu0 %1175, %v1049
        %v1177 = vpop.permute.xlu0 %1176
        %1178 = vset.pattern.permute.xlu0 0
        %1179 = vperm.xlu0 %1178, %v1050
        %v1180 = vpop.permute.xlu0 %1179
        %1181 = vset.pattern.permute.xlu0 0
        %1182 = vperm.xlu0 %1181, %v1051
        %v1183 = vpop.permute.xlu0 %1182
        %1184 = vset.pattern.permute.xlu0 0
        %1185 = vperm.xlu0 %1184, %v1052
        %v1186 = vpop.permute.xlu0 %1185
        %1187 = vset.pattern.permute.xlu0 0
        %1188 = vperm.xlu0 %1187, %v1053
        %v1189 = vpop.permute.xlu0 %1188
        %1190 = vset.pattern.permute.xlu0 0
        %1191 = vperm.xlu0 %1190, %v1054
        %v1192 = vpop.permute.xlu0 %1191
        %1193 = vset.pattern.permute.xlu0 0
        %1194 = vperm.xlu0 %1193, %v1055
        %v1195 = vpop.permute.xlu0 %1194
        %1196 = vset.pattern.permute.xlu0 0
        %1197 = vperm.xlu0 %1196, %v1056
        %v1198 = vpop.permute.xlu0 %1197
        %1199 = vset.pattern.permute.xlu0 0
        %1200 = vperm.xlu0 %1199, %v1057
        %v1201 = vpop.permute.xlu0 %1200
        %1202 = vset.pattern.permute.xlu0 0
        %1203 = vperm.xlu0 %1202, %v1058
        %v1204 = vpop.permute.xlu0 %1203
        %1205 = vset.pattern.permute.xlu0 0
        %1206 = vperm.xlu0 %1205, %v1059
        %v1207 = vpop.permute.xlu0 %1206
        %1208 = vset.pattern.permute.xlu0 0
        %1209 = vperm.xlu0 %1208, %v1060
        %v1210 = vpop.permute.xlu0 %1209
        %1211 = vset.pattern.permute.xlu0 0
        %1212 = vperm.xlu0 %1211, %v1061
        %v1213 = vpop.permute.xlu0 %1212
        %1214 = vset.pattern.permute.xlu0 0
        %1215 = vperm.xlu0 %1214, %v1062
        %v1216 = vpop.permute.xlu0 %1215
        %1217 = vset.pattern.permute.xlu0 0
        %1218 = vperm.xlu0 %1217, %v1063
        %v1219 = vpop.permute.xlu0 %1218
        %1220 = vset.pattern.permute.xlu0 0
        %1221 = vperm.xlu0 %1220, %v1064
        %v1222 = vpop.permute.xlu0 %1221
        %1223 = vset.pattern.permute.xlu0 0
        %1224 = vperm.xlu0 %1223, %v1065
        %v1225 = vpop.permute.xlu0 %1224
        %v1226 = vlaneseq
        %v1227 = vand.u32 %v1226, 127
        %v1228 = vperm.slane %v1108, %v1227
        %v1229 = vadd.s32 %v1227, 4294967288
        %v1230 = vperm.slane %v1111, %v1229
        %vm1231 = vcmask 130112
        %v1232 = vsel %vm1231, %v1230, %v1228
        %v1233 = vadd.s32 %v1227, 4294967280
        %v1234 = vperm.slane %v1114, %v1233
        %vm1235 = vcmask 195712
        %v1236 = vsel %vm1235, %v1234, %v1232
        %v1237 = vadd.s32 %v1227, 4294967272
        %v1238 = vperm.slane %v1117, %v1237
        %vm1239 = vcmask 261312
        %v1240 = vsel %vm1239, %v1238, %v1236
        %v1241 = vadd.s32 %v1227, 4294967264
        %v1242 = vperm.slane %v1120, %v1241
        %vm1243 = vcmask 326912
        %v1244 = vsel %vm1243, %v1242, %v1240
        %v1245 = vperm.slane %v1123, %v1227
        %v1246 = vperm.slane %v1126, %v1229
        %v1247 = vsel %vm1231, %v1246, %v1245
        %v1248 = vperm.slane %v1129, %v1233
        %v1249 = vsel %vm1235, %v1248, %v1247
        %v1250 = vperm.slane %v1132, %v1237
        %v1251 = vsel %vm1239, %v1250, %v1249
        %v1252 = vperm.slane %v1135, %v1241
        %v1253 = vsel %vm1243, %v1252, %v1251
        %v1254 = vperm.slane %v1138, %v1227
        %v1255 = vperm.slane %v1141, %v1229
        %v1256 = vsel %vm1231, %v1255, %v1254
        %v1257 = vperm.slane %v1144, %v1233
        %v1258 = vsel %vm1235, %v1257, %v1256
        %v1259 = vperm.slane %v1147, %v1237
        %v1260 = vsel %vm1239, %v1259, %v1258
        %v1261 = vperm.slane %v1150, %v1241
        %v1262 = vsel %vm1243, %v1261, %v1260
        %v1263 = vperm.slane %v1153, %v1227
        %v1264 = vperm.slane %v1156, %v1229
        %v1265 = vsel %vm1231, %v1264, %v1263
        %v1266 = vperm.slane %v1159, %v1233
        %v1267 = vsel %vm1235, %v1266, %v1265
        %v1268 = vperm.slane %v1162, %v1237
        %v1269 = vsel %vm1239, %v1268, %v1267
        %v1270 = vperm.slane %v1165, %v1241
        %v1271 = vsel %vm1243, %v1270, %v1269
        %v1272 = vperm.slane %v1168, %v1227
        %v1273 = vperm.slane %v1171, %v1229
        %v1274 = vsel %vm1231, %v1273, %v1272
        %v1275 = vperm.slane %v1174, %v1233
        %v1276 = vsel %vm1235, %v1275, %v1274
        %v1277 = vperm.slane %v1177, %v1237
        %v1278 = vsel %vm1239, %v1277, %v1276
        %v1279 = vperm.slane %v1180, %v1241
        %v1280 = vsel %vm1243, %v1279, %v1278
        %v1281 = vperm.slane %v1183, %v1227
        %v1282 = vperm.slane %v1186, %v1229
        %v1283 = vsel %vm1231, %v1282, %v1281
        %v1284 = vperm.slane %v1189, %v1233
        %v1285 = vsel %vm1235, %v1284, %v1283
        %v1286 = vperm.slane %v1192, %v1237
        %v1287 = vsel %vm1239, %v1286, %v1285
        %v1288 = vperm.slane %v1195, %v1241
        %v1289 = vsel %vm1243, %v1288, %v1287
        %v1290 = vperm.slane %v1198, %v1227
        %v1291 = vperm.slane %v1201, %v1229
        %v1292 = vsel %vm1231, %v1291, %v1290
        %v1293 = vperm.slane %v1204, %v1233
        %v1294 = vsel %vm1235, %v1293, %v1292
        %v1295 = vperm.slane %v1207, %v1237
        %v1296 = vsel %vm1239, %v1295, %v1294
        %v1297 = vperm.slane %v1210, %v1241
        %v1298 = vsel %vm1243, %v1297, %v1296
        %v1299 = vperm.slane %v1213, %v1227
        %v1300 = vperm.slane %v1216, %v1229
        %v1301 = vsel %vm1231, %v1300, %v1299
        %v1302 = vperm.slane %v1219, %v1233
        %v1303 = vsel %vm1235, %v1302, %v1301
        %v1304 = vperm.slane %v1222, %v1237
        %v1305 = vsel %vm1239, %v1304, %v1303
        %v1306 = vperm.slane %v1225, %v1241
        %v1307 = vsel %vm1243, %v1306, %v1305
        %vm1308 = vcmask 1041409
        %v1309 = vsel %vm1308, %v1253, %v1244
        %vm1310 = vcmask 1042434
        %v1311 = vsel %vm1310, %v1262, %v1309
        %vm1312 = vcmask 1043459
        %v1313 = vsel %vm1312, %v1271, %v1311
        %vm1314 = vcmask 1044484
        %v1315 = vsel %vm1314, %v1280, %v1313
        %vm1316 = vcmask 1045509
        %v1317 = vsel %vm1316, %v1289, %v1315
        %vm1318 = vcmask 1046534
        %v1319 = vsel %vm1318, %v1298, %v1317
        %vm1320 = vcmask 1047559
        %v1321 = vsel %vm1320, %v1307, %v1319
        %vm1323 = vcmask 326656
        %v1324 = vsel %vm1323, %v1321, -inf
        %1325 = vmax.xlane.f32.xlu0 %v1324
        %v1326 = vpop.xlane.xlu0 %1325
        %v1328 = vperm.slane %v1326, 0
        %v1329 = vperm.slane %v1326, 1
        %v1330 = vperm.slane %v1326, 2
        %v1331 = vperm.slane %v1326, 3
        %v1332 = vperm.slane %v1326, 4
        %v1333 = vperm.slane %v1326, 5
        %v1334 = vperm.slane %v1326, 6
        %v1335 = vperm.slane %v1326, 7
        %v1344 = vsub.f32 %v1026, %v1328
        %v1345 = vsub.f32 %v1027, %v1328
        %v1346 = vsub.f32 %v1028, %v1328
        %v1347 = vsub.f32 %v1029, %v1328
        %v1348 = vsub.f32 %v1030, %v1328
        %v1349 = vsub.f32 %v1031, %v1329
        %v1350 = vsub.f32 %v1032, %v1329
        %v1351 = vsub.f32 %v1033, %v1329
        %v1352 = vsub.f32 %v1034, %v1329
        %v1353 = vsub.f32 %v1035, %v1329
        %v1354 = vsub.f32 %v1036, %v1330
        %v1355 = vsub.f32 %v1037, %v1330
        %v1356 = vsub.f32 %v1038, %v1330
        %v1357 = vsub.f32 %v1039, %v1330
        %v1358 = vsub.f32 %v1040, %v1330
        %v1359 = vsub.f32 %v1041, %v1331
        %v1360 = vsub.f32 %v1042, %v1331
        %v1361 = vsub.f32 %v1043, %v1331
        %v1362 = vsub.f32 %v1044, %v1331
        %v1363 = vsub.f32 %v1045, %v1331
        %v1364 = vsub.f32 %v1046, %v1332
        %v1365 = vsub.f32 %v1047, %v1332
        %v1366 = vsub.f32 %v1048, %v1332
        %v1367 = vsub.f32 %v1049, %v1332
        %v1368 = vsub.f32 %v1050, %v1332
        %v1369 = vsub.f32 %v1051, %v1333
        %v1370 = vsub.f32 %v1052, %v1333
        %v1371 = vsub.f32 %v1053, %v1333
        %v1372 = vsub.f32 %v1054, %v1333
        %v1373 = vsub.f32 %v1055, %v1333
        %v1374 = vsub.f32 %v1056, %v1334
        %v1375 = vsub.f32 %v1057, %v1334
        %v1376 = vsub.f32 %v1058, %v1334
        %v1377 = vsub.f32 %v1059, %v1334
        %v1378 = vsub.f32 %v1060, %v1334
        %v1379 = vsub.f32 %v1061, %v1335
        %v1380 = vsub.f32 %v1062, %v1335
        %v1381 = vsub.f32 %v1063, %v1335
        %v1382 = vsub.f32 %v1064, %v1335
        %v1383 = vsub.f32 %v1065, %v1335
        %v1384 = vmul.f32 %v1344, 1.442695
        %v1385 = vpow.pop %v1384
        %v1386 = vmul.f32 %v1345, 1.442695
        %v1387 = vpow.pop %v1386
        %v1388 = vmul.f32 %v1346, 1.442695
        %v1389 = vpow.pop %v1388
        %v1390 = vmul.f32 %v1347, 1.442695
        %v1391 = vpow.pop %v1390
        %v1392 = vmul.f32 %v1348, 1.442695
        %v1393 = vpow.pop %v1392
        %v1394 = vmul.f32 %v1349, 1.442695
        %v1395 = vpow.pop %v1394
        %v1396 = vmul.f32 %v1350, 1.442695
        %v1397 = vpow.pop %v1396
        %v1398 = vmul.f32 %v1351, 1.442695
        %v1399 = vpow.pop %v1398
        %v1400 = vmul.f32 %v1352, 1.442695
        %v1401 = vpow.pop %v1400
        %v1402 = vmul.f32 %v1353, 1.442695
        %v1403 = vpow.pop %v1402
        %v1404 = vmul.f32 %v1354, 1.442695
        %v1405 = vpow.pop %v1404
        %v1406 = vmul.f32 %v1355, 1.442695
        %v1407 = vpow.pop %v1406
        %v1408 = vmul.f32 %v1356, 1.442695
        %v1409 = vpow.pop %v1408
        %v1410 = vmul.f32 %v1357, 1.442695
        %v1411 = vpow.pop %v1410
        %v1412 = vmul.f32 %v1358, 1.442695
        %v1413 = vpow.pop %v1412
        %v1414 = vmul.f32 %v1359, 1.442695
        %v1415 = vpow.pop %v1414
        %v1416 = vmul.f32 %v1360, 1.442695
        %v1417 = vpow.pop %v1416
        %v1418 = vmul.f32 %v1361, 1.442695
        %v1419 = vpow.pop %v1418
        %v1420 = vmul.f32 %v1362, 1.442695
        %v1421 = vpow.pop %v1420
        %v1422 = vmul.f32 %v1363, 1.442695
        %v1423 = vpow.pop %v1422
        %v1424 = vmul.f32 %v1364, 1.442695
        %v1425 = vpow.pop %v1424
        %v1426 = vmul.f32 %v1365, 1.442695
        %v1427 = vpow.pop %v1426
        %v1428 = vmul.f32 %v1366, 1.442695
        %v1429 = vpow.pop %v1428
        %v1430 = vmul.f32 %v1367, 1.442695
        %v1431 = vpow.pop %v1430
        %v1432 = vmul.f32 %v1368, 1.442695
        %v1433 = vpow.pop %v1432
        %v1434 = vmul.f32 %v1369, 1.442695
        %v1435 = vpow.pop %v1434
        %v1436 = vmul.f32 %v1370, 1.442695
        %v1437 = vpow.pop %v1436
        %v1438 = vmul.f32 %v1371, 1.442695
        %v1439 = vpow.pop %v1438
        %v1440 = vmul.f32 %v1372, 1.442695
        %v1441 = vpow.pop %v1440
        %v1442 = vmul.f32 %v1373, 1.442695
        %v1443 = vpow.pop %v1442
        %v1444 = vmul.f32 %v1374, 1.442695
        %v1445 = vpow.pop %v1444
        %v1446 = vmul.f32 %v1375, 1.442695
        %v1447 = vpow.pop %v1446
        %v1448 = vmul.f32 %v1376, 1.442695
        %v1449 = vpow.pop %v1448
        %v1450 = vmul.f32 %v1377, 1.442695
        %v1451 = vpow.pop %v1450
        %v1452 = vmul.f32 %v1378, 1.442695
        %v1453 = vpow.pop %v1452
        %v1454 = vmul.f32 %v1379, 1.442695
        %v1455 = vpow.pop %v1454
        %v1456 = vmul.f32 %v1380, 1.442695
        %v1457 = vpow.pop %v1456
        %v1458 = vmul.f32 %v1381, 1.442695
        %v1459 = vpow.pop %v1458
        %v1460 = vmul.f32 %v1382, 1.442695
        %v1461 = vpow.pop %v1460
        %v1462 = vmul.f32 %v1383, 1.442695
        %v1463 = vpow.pop %v1462
        %1504 = vset.pattern.permute.xlu0 0
        %1505 = vperm.xlu0 %1504, %v1385
        %v1506 = vpop.permute.xlu0 %1505
        %1507 = vset.pattern.permute.xlu0 0
        %1508 = vperm.xlu0 %1507, %v1387
        %v1509 = vpop.permute.xlu0 %1508
        %1510 = vset.pattern.permute.xlu0 0
        %1511 = vperm.xlu0 %1510, %v1389
        %v1512 = vpop.permute.xlu0 %1511
        %1513 = vset.pattern.permute.xlu0 0
        %1514 = vperm.xlu0 %1513, %v1391
        %v1515 = vpop.permute.xlu0 %1514
        %1516 = vset.pattern.permute.xlu0 0
        %1517 = vperm.xlu0 %1516, %v1393
        %v1518 = vpop.permute.xlu0 %1517
        %1519 = vset.pattern.permute.xlu0 0
        %1520 = vperm.xlu0 %1519, %v1395
        %v1521 = vpop.permute.xlu0 %1520
        %1522 = vset.pattern.permute.xlu0 0
        %1523 = vperm.xlu0 %1522, %v1397
        %v1524 = vpop.permute.xlu0 %1523
        %1525 = vset.pattern.permute.xlu0 0
        %1526 = vperm.xlu0 %1525, %v1399
        %v1527 = vpop.permute.xlu0 %1526
        %1528 = vset.pattern.permute.xlu0 0
        %1529 = vperm.xlu0 %1528, %v1401
        %v1530 = vpop.permute.xlu0 %1529
        %1531 = vset.pattern.permute.xlu0 0
        %1532 = vperm.xlu0 %1531, %v1403
        %v1533 = vpop.permute.xlu0 %1532
        %1534 = vset.pattern.permute.xlu0 0
        %1535 = vperm.xlu0 %1534, %v1405
        %v1536 = vpop.permute.xlu0 %1535
        %1537 = vset.pattern.permute.xlu0 0
        %1538 = vperm.xlu0 %1537, %v1407
        %v1539 = vpop.permute.xlu0 %1538
        %1540 = vset.pattern.permute.xlu0 0
        %1541 = vperm.xlu0 %1540, %v1409
        %v1542 = vpop.permute.xlu0 %1541
        %1543 = vset.pattern.permute.xlu0 0
        %1544 = vperm.xlu0 %1543, %v1411
        %v1545 = vpop.permute.xlu0 %1544
        %1546 = vset.pattern.permute.xlu0 0
        %1547 = vperm.xlu0 %1546, %v1413
        %v1548 = vpop.permute.xlu0 %1547
        %1549 = vset.pattern.permute.xlu0 0
        %1550 = vperm.xlu0 %1549, %v1415
        %v1551 = vpop.permute.xlu0 %1550
        %1552 = vset.pattern.permute.xlu0 0
        %1553 = vperm.xlu0 %1552, %v1417
        %v1554 = vpop.permute.xlu0 %1553
        %1555 = vset.pattern.permute.xlu0 0
        %1556 = vperm.xlu0 %1555, %v1419
        %v1557 = vpop.permute.xlu0 %1556
        %1558 = vset.pattern.permute.xlu0 0
        %1559 = vperm.xlu0 %1558, %v1421
        %v1560 = vpop.permute.xlu0 %1559
        %1561 = vset.pattern.permute.xlu0 0
        %1562 = vperm.xlu0 %1561, %v1423
        %v1563 = vpop.permute.xlu0 %1562
        %1564 = vset.pattern.permute.xlu0 0
        %1565 = vperm.xlu0 %1564, %v1425
        %v1566 = vpop.permute.xlu0 %1565
        %1567 = vset.pattern.permute.xlu0 0
        %1568 = vperm.xlu0 %1567, %v1427
        %v1569 = vpop.permute.xlu0 %1568
        %1570 = vset.pattern.permute.xlu0 0
        %1571 = vperm.xlu0 %1570, %v1429
        %v1572 = vpop.permute.xlu0 %1571
        %1573 = vset.pattern.permute.xlu0 0
        %1574 = vperm.xlu0 %1573, %v1431
        %v1575 = vpop.permute.xlu0 %1574
        %1576 = vset.pattern.permute.xlu0 0
        %1577 = vperm.xlu0 %1576, %v1433
        %v1578 = vpop.permute.xlu0 %1577
        %1579 = vset.pattern.permute.xlu0 0
        %1580 = vperm.xlu0 %1579, %v1435
        %v1581 = vpop.permute.xlu0 %1580
        %1582 = vset.pattern.permute.xlu0 0
        %1583 = vperm.xlu0 %1582, %v1437
        %v1584 = vpop.permute.xlu0 %1583
        %1585 = vset.pattern.permute.xlu0 0
        %1586 = vperm.xlu0 %1585, %v1439
        %v1587 = vpop.permute.xlu0 %1586
        %1588 = vset.pattern.permute.xlu0 0
        %1589 = vperm.xlu0 %1588, %v1441
        %v1590 = vpop.permute.xlu0 %1589
        %1591 = vset.pattern.permute.xlu0 0
        %1592 = vperm.xlu0 %1591, %v1443
        %v1593 = vpop.permute.xlu0 %1592
        %1594 = vset.pattern.permute.xlu0 0
        %1595 = vperm.xlu0 %1594, %v1445
        %v1596 = vpop.permute.xlu0 %1595
        %1597 = vset.pattern.permute.xlu0 0
        %1598 = vperm.xlu0 %1597, %v1447
        %v1599 = vpop.permute.xlu0 %1598
        %1600 = vset.pattern.permute.xlu0 0
        %1601 = vperm.xlu0 %1600, %v1449
        %v1602 = vpop.permute.xlu0 %1601
        %1603 = vset.pattern.permute.xlu0 0
        %1604 = vperm.xlu0 %1603, %v1451
        %v1605 = vpop.permute.xlu0 %1604
        %1606 = vset.pattern.permute.xlu0 0
        %1607 = vperm.xlu0 %1606, %v1453
        %v1608 = vpop.permute.xlu0 %1607
        %1609 = vset.pattern.permute.xlu0 0
        %1610 = vperm.xlu0 %1609, %v1455
        %v1611 = vpop.permute.xlu0 %1610
        %1612 = vset.pattern.permute.xlu0 0
        %1613 = vperm.xlu0 %1612, %v1457
        %v1614 = vpop.permute.xlu0 %1613
        %1615 = vset.pattern.permute.xlu0 0
        %1616 = vperm.xlu0 %1615, %v1459
        %v1617 = vpop.permute.xlu0 %1616
        %1618 = vset.pattern.permute.xlu0 0
        %1619 = vperm.xlu0 %1618, %v1461
        %v1620 = vpop.permute.xlu0 %1619
        %1621 = vset.pattern.permute.xlu0 0
        %1622 = vperm.xlu0 %1621, %v1463
        %v1623 = vpop.permute.xlu0 %1622
        %v1624 = vperm.slane %v1506, %v1227
        %v1625 = vperm.slane %v1509, %v1229
        %v1626 = vsel %vm1231, %v1625, %v1624
        %v1627 = vperm.slane %v1512, %v1233
        %v1628 = vsel %vm1235, %v1627, %v1626
        %v1629 = vperm.slane %v1515, %v1237
        %v1630 = vsel %vm1239, %v1629, %v1628
        %v1631 = vperm.slane %v1518, %v1241
        %v1632 = vsel %vm1243, %v1631, %v1630
        %v1633 = vperm.slane %v1521, %v1227
        %v1634 = vperm.slane %v1524, %v1229
        %v1635 = vsel %vm1231, %v1634, %v1633
        %v1636 = vperm.slane %v1527, %v1233
        %v1637 = vsel %vm1235, %v1636, %v1635
        %v1638 = vperm.slane %v1530, %v1237
        %v1639 = vsel %vm1239, %v1638, %v1637
        %v1640 = vperm.slane %v1533, %v1241
        %v1641 = vsel %vm1243, %v1640, %v1639
        %v1642 = vperm.slane %v1536, %v1227
        %v1643 = vperm.slane %v1539, %v1229
        %v1644 = vsel %vm1231, %v1643, %v1642
        %v1645 = vperm.slane %v1542, %v1233
        %v1646 = vsel %vm1235, %v1645, %v1644
        %v1647 = vperm.slane %v1545, %v1237
        %v1648 = vsel %vm1239, %v1647, %v1646
        %v1649 = vperm.slane %v1548, %v1241
        %v1650 = vsel %vm1243, %v1649, %v1648
        %v1651 = vperm.slane %v1551, %v1227
        %v1652 = vperm.slane %v1554, %v1229
        %v1653 = vsel %vm1231, %v1652, %v1651
        %v1654 = vperm.slane %v1557, %v1233
        %v1655 = vsel %vm1235, %v1654, %v1653
        %v1656 = vperm.slane %v1560, %v1237
        %v1657 = vsel %vm1239, %v1656, %v1655
        %v1658 = vperm.slane %v1563, %v1241
        %v1659 = vsel %vm1243, %v1658, %v1657
        %v1660 = vperm.slane %v1566, %v1227
        %v1661 = vperm.slane %v1569, %v1229
        %v1662 = vsel %vm1231, %v1661, %v1660
        %v1663 = vperm.slane %v1572, %v1233
        %v1664 = vsel %vm1235, %v1663, %v1662
        %v1665 = vperm.slane %v1575, %v1237
        %v1666 = vsel %vm1239, %v1665, %v1664
        %v1667 = vperm.slane %v1578, %v1241
        %v1668 = vsel %vm1243, %v1667, %v1666
        %v1669 = vperm.slane %v1581, %v1227
        %v1670 = vperm.slane %v1584, %v1229
        %v1671 = vsel %vm1231, %v1670, %v1669
        %v1672 = vperm.slane %v1587, %v1233
        %v1673 = vsel %vm1235, %v1672, %v1671
        %v1674 = vperm.slane %v1590, %v1237
        %v1675 = vsel %vm1239, %v1674, %v1673
        %v1676 = vperm.slane %v1593, %v1241
        %v1677 = vsel %vm1243, %v1676, %v1675
        %v1678 = vperm.slane %v1596, %v1227
        %v1679 = vperm.slane %v1599, %v1229
        %v1680 = vsel %vm1231, %v1679, %v1678
        %v1681 = vperm.slane %v1602, %v1233
        %v1682 = vsel %vm1235, %v1681, %v1680
        %v1683 = vperm.slane %v1605, %v1237
        %v1684 = vsel %vm1239, %v1683, %v1682
        %v1685 = vperm.slane %v1608, %v1241
        %v1686 = vsel %vm1243, %v1685, %v1684
        %v1687 = vperm.slane %v1611, %v1227
        %v1688 = vperm.slane %v1614, %v1229
        %v1689 = vsel %vm1231, %v1688, %v1687
        %v1690 = vperm.slane %v1617, %v1233
        %v1691 = vsel %vm1235, %v1690, %v1689
        %v1692 = vperm.slane %v1620, %v1237
        %v1693 = vsel %vm1239, %v1692, %v1691
        %v1694 = vperm.slane %v1623, %v1241
        %v1695 = vsel %vm1243, %v1694, %v1693
        %v1696 = vsel %vm1308, %v1641, %v1632
        %v1697 = vsel %vm1310, %v1650, %v1696
        %v1698 = vsel %vm1312, %v1659, %v1697
        %v1699 = vsel %vm1314, %v1668, %v1698
        %v1700 = vsel %vm1316, %v1677, %v1699
        %v1701 = vsel %vm1318, %v1686, %v1700
        %v1702 = vsel %vm1320, %v1695, %v1701
        %v1704 = vsel %vm1323, %v1702, 0.0
        %1705 = vadd.xlane.f32.xlu0 %v1704
        %v1706 = vpop.xlane.xlu0 %1705
        %v1707 = vrcp.pop %v1706
        %v1709 = vperm.slane %v1707, 0
        %v1710 = vperm.slane %v1707, 1
        %v1711 = vperm.slane %v1707, 2
        %v1712 = vperm.slane %v1707, 3
        %v1713 = vperm.slane %v1707, 4
        %v1714 = vperm.slane %v1707, 5
        %v1715 = vperm.slane %v1707, 6
        %v1716 = vperm.slane %v1707, 7
        %v1725 = vmul.f32 %v1385, %v1709
        %v1726 = vmul.f32 %v1387, %v1709
        %v1727 = vmul.f32 %v1389, %v1709
        %v1728 = vmul.f32 %v1391, %v1709
        %v1729 = vmul.f32 %v1393, %v1709
        %v1730 = vmul.f32 %v1395, %v1710
        %v1731 = vmul.f32 %v1397, %v1710
        %v1732 = vmul.f32 %v1399, %v1710
        %v1733 = vmul.f32 %v1401, %v1710
        %v1734 = vmul.f32 %v1403, %v1710
        %v1735 = vmul.f32 %v1405, %v1711
        %v1736 = vmul.f32 %v1407, %v1711
        %v1737 = vmul.f32 %v1409, %v1711
        %v1738 = vmul.f32 %v1411, %v1711
        %v1739 = vmul.f32 %v1413, %v1711
        %v1740 = vmul.f32 %v1415, %v1712
        %v1741 = vmul.f32 %v1417, %v1712
        %v1742 = vmul.f32 %v1419, %v1712
        %v1743 = vmul.f32 %v1421, %v1712
        %v1744 = vmul.f32 %v1423, %v1712
        %v1745 = vmul.f32 %v1425, %v1713
        %v1746 = vmul.f32 %v1427, %v1713
        %v1747 = vmul.f32 %v1429, %v1713
        %v1748 = vmul.f32 %v1431, %v1713
        %v1749 = vmul.f32 %v1433, %v1713
        %v1750 = vmul.f32 %v1435, %v1714
        %v1751 = vmul.f32 %v1437, %v1714
        %v1752 = vmul.f32 %v1439, %v1714
        %v1753 = vmul.f32 %v1441, %v1714
        %v1754 = vmul.f32 %v1443, %v1714
        %v1755 = vmul.f32 %v1445, %v1715
        %v1756 = vmul.f32 %v1447, %v1715
        %v1757 = vmul.f32 %v1449, %v1715
        %v1758 = vmul.f32 %v1451, %v1715
        %v1759 = vmul.f32 %v1453, %v1715
        %v1760 = vmul.f32 %v1455, %v1716
        %v1761 = vmul.f32 %v1457, %v1716
        %v1762 = vmul.f32 %v1459, %v1716
        %v1763 = vmul.f32 %v1461, %v1716
        %v1764 = vmul.f32 %v1463, %v1716
        %1766 = vset.pattern.permute.xlu0 0
        %1767 = vperm.xlu0 %1766, %v1725
        %v1768 = vpop.permute.xlu0 %1767
        %1771 = vset.pattern.permute.xlu0 0
        %1772 = vperm.xlu0 %1771, %v1726
        %v1773 = vpop.permute.xlu0 %1772
        %1776 = vset.pattern.permute.xlu0 0
        %1777 = vperm.xlu0 %1776, %v1727
        %v1778 = vpop.permute.xlu0 %1777
        %1781 = vset.pattern.permute.xlu0 0
        %1782 = vperm.xlu0 %1781, %v1728
        %v1783 = vpop.permute.xlu0 %1782
        %1786 = vset.pattern.permute.xlu0 0
        %1787 = vperm.xlu0 %1786, %v1729
        %v1788 = vpop.permute.xlu0 %1787
        %1791 = vset.pattern.permute.xlu0 0
        %1792 = vperm.xlu0 %1791, %v1730
        %v1793 = vpop.permute.xlu0 %1792
        %1796 = vset.pattern.permute.xlu0 0
        %1797 = vperm.xlu0 %1796, %v1731
        %v1798 = vpop.permute.xlu0 %1797
        %1801 = vset.pattern.permute.xlu0 0
        %1802 = vperm.xlu0 %1801, %v1732
        %v1803 = vpop.permute.xlu0 %1802
        %1806 = vset.pattern.permute.xlu0 0
        %1807 = vperm.xlu0 %1806, %v1733
        %v1808 = vpop.permute.xlu0 %1807
        %1811 = vset.pattern.permute.xlu0 0
        %1812 = vperm.xlu0 %1811, %v1734
        %v1813 = vpop.permute.xlu0 %1812
        %1816 = vset.pattern.permute.xlu0 0
        %1817 = vperm.xlu0 %1816, %v1735
        %v1818 = vpop.permute.xlu0 %1817
        %1821 = vset.pattern.permute.xlu0 0
        %1822 = vperm.xlu0 %1821, %v1736
        %v1823 = vpop.permute.xlu0 %1822
        %1826 = vset.pattern.permute.xlu0 0
        %1827 = vperm.xlu0 %1826, %v1737
        %v1828 = vpop.permute.xlu0 %1827
        %1831 = vset.pattern.permute.xlu0 0
        %1832 = vperm.xlu0 %1831, %v1738
        %v1833 = vpop.permute.xlu0 %1832
        %1836 = vset.pattern.permute.xlu0 0
        %1837 = vperm.xlu0 %1836, %v1739
        %v1838 = vpop.permute.xlu0 %1837
        %1841 = vset.pattern.permute.xlu0 0
        %1842 = vperm.xlu0 %1841, %v1740
        %v1843 = vpop.permute.xlu0 %1842
        %1846 = vset.pattern.permute.xlu0 0
        %1847 = vperm.xlu0 %1846, %v1741
        %v1848 = vpop.permute.xlu0 %1847
        %1851 = vset.pattern.permute.xlu0 0
        %1852 = vperm.xlu0 %1851, %v1742
        %v1853 = vpop.permute.xlu0 %1852
        %1856 = vset.pattern.permute.xlu0 0
        %1857 = vperm.xlu0 %1856, %v1743
        %v1858 = vpop.permute.xlu0 %1857
        %1861 = vset.pattern.permute.xlu0 0
        %1862 = vperm.xlu0 %1861, %v1744
        %v1863 = vpop.permute.xlu0 %1862
        %1866 = vset.pattern.permute.xlu0 0
        %1867 = vperm.xlu0 %1866, %v1745
        %v1868 = vpop.permute.xlu0 %1867
        %1871 = vset.pattern.permute.xlu0 0
        %1872 = vperm.xlu0 %1871, %v1746
        %v1873 = vpop.permute.xlu0 %1872
        %1876 = vset.pattern.permute.xlu0 0
        %1877 = vperm.xlu0 %1876, %v1747
        %v1878 = vpop.permute.xlu0 %1877
        %1881 = vset.pattern.permute.xlu0 0
        %1882 = vperm.xlu0 %1881, %v1748
        %v1883 = vpop.permute.xlu0 %1882
        %1886 = vset.pattern.permute.xlu0 0
        %1887 = vperm.xlu0 %1886, %v1749
        %v1888 = vpop.permute.xlu0 %1887
        %1891 = vset.pattern.permute.xlu0 0
        %1892 = vperm.xlu0 %1891, %v1750
        %v1893 = vpop.permute.xlu0 %1892
        %1896 = vset.pattern.permute.xlu0 0
        %1897 = vperm.xlu0 %1896, %v1751
        %v1898 = vpop.permute.xlu0 %1897
        %1901 = vset.pattern.permute.xlu0 0
        %1902 = vperm.xlu0 %1901, %v1752
        %v1903 = vpop.permute.xlu0 %1902
        %1906 = vset.pattern.permute.xlu0 0
        %1907 = vperm.xlu0 %1906, %v1753
        %v1908 = vpop.permute.xlu0 %1907
        %1911 = vset.pattern.permute.xlu0 0
        %1912 = vperm.xlu0 %1911, %v1754
        %v1913 = vpop.permute.xlu0 %1912
        %1916 = vset.pattern.permute.xlu0 0
        %1917 = vperm.xlu0 %1916, %v1755
        %v1918 = vpop.permute.xlu0 %1917
        %1921 = vset.pattern.permute.xlu0 0
        %1922 = vperm.xlu0 %1921, %v1756
        %v1923 = vpop.permute.xlu0 %1922
        %1926 = vset.pattern.permute.xlu0 0
        %1927 = vperm.xlu0 %1926, %v1757
        %v1928 = vpop.permute.xlu0 %1927
        %1931 = vset.pattern.permute.xlu0 0
        %1932 = vperm.xlu0 %1931, %v1758
        %v1933 = vpop.permute.xlu0 %1932
        %1936 = vset.pattern.permute.xlu0 0
        %1937 = vperm.xlu0 %1936, %v1759
        %v1938 = vpop.permute.xlu0 %1937
        %1941 = vset.pattern.permute.xlu0 0
        %1942 = vperm.xlu0 %1941, %v1760
        %v1943 = vpop.permute.xlu0 %1942
        %1946 = vset.pattern.permute.xlu0 0
        %1947 = vperm.xlu0 %1946, %v1761
        %v1948 = vpop.permute.xlu0 %1947
        %1951 = vset.pattern.permute.xlu0 0
        %1952 = vperm.xlu0 %1951, %v1762
        %v1953 = vpop.permute.xlu0 %1952
        %1956 = vset.pattern.permute.xlu0 0
        %1957 = vperm.xlu0 %1956, %v1763
        %v1958 = vpop.permute.xlu0 %1957
        %1961 = vset.pattern.permute.xlu0 0
        %1962 = vperm.xlu0 %1961, %v1764
        %v1963 = vpop.permute.xlu0 %1962
        %v1965 = vmul.f32 %v1768, %v279
        %v1966 = vmul.f32 %v1773, %v280
        %v1967 = vmul.f32 %v1778, %v281
        %v1968 = vmul.f32 %v1783, %v282
        %v1969 = vmul.f32 %v1788, %v283
        %v1970 = vmul.f32 %v1793, %v284
        %v1971 = vmul.f32 %v1798, %v285
        %v1972 = vmul.f32 %v1803, %v286
        %v1973 = vmul.f32 %v1808, %v287
        %v1974 = vmul.f32 %v1813, %v288
        %v1975 = vmul.f32 %v1818, %v289
        %v1976 = vmul.f32 %v1823, %v290
        %v1977 = vmul.f32 %v1828, %v291
        %v1978 = vmul.f32 %v1833, %v292
        %v1979 = vmul.f32 %v1838, %v293
        %v1980 = vmul.f32 %v1843, %v294
        %v1981 = vmul.f32 %v1848, %v295
        %v1982 = vmul.f32 %v1853, %v296
        %v1983 = vmul.f32 %v1858, %v297
        %v1984 = vmul.f32 %v1863, %v298
        %v1985 = vmul.f32 %v1868, %v299
        %v1986 = vmul.f32 %v1873, %v300
        %v1987 = vmul.f32 %v1878, %v301
        %v1988 = vmul.f32 %v1883, %v302
        %v1989 = vmul.f32 %v1888, %v303
        %v1990 = vmul.f32 %v1893, %v304
        %v1991 = vmul.f32 %v1898, %v305
        %v1992 = vmul.f32 %v1903, %v306
        %v1993 = vmul.f32 %v1908, %v307
        %v1994 = vmul.f32 %v1913, %v308
        %v1995 = vmul.f32 %v1918, %v309
        %v1996 = vmul.f32 %v1923, %v310
        %v1997 = vmul.f32 %v1928, %v311
        %v1998 = vmul.f32 %v1933, %v312
        %v1999 = vmul.f32 %v1938, %v313
        %v2000 = vmul.f32 %v1943, %v314
        %v2001 = vmul.f32 %v1948, %v315
        %v2002 = vmul.f32 %v1953, %v316
        %v2003 = vmul.f32 %v1958, %v317
        %v2004 = vmul.f32 %v1963, %v318
        %v2005 = vsel %vm361, %v1965, 0.0
        %v2006 = vsel %vm361, %v1966, 0.0
        %v2007 = vadd.f32 %v2005, %v2006
        %v2008 = vsel %vm361, %v1967, 0.0
        %v2009 = vadd.f32 %v2007, %v2008
        %v2010 = vsel %vm361, %v1968, 0.0
        %v2011 = vadd.f32 %v2009, %v2010
        %v2012 = vsel %vm361, %v1969, 0.0
        %v2013 = vadd.f32 %v2011, %v2012
        %v2014 = vrot.slane %v2013, 4
        %v2015 = vadd.f32 %v2013, %v2014
        %v2016 = vrot.slane %v2015, 2
        %v2017 = vadd.f32 %v2015, %v2016
        %v2018 = vrot.slane %v2017, 1
        %v2019 = vadd.f32 %v2017, %v2018
        %v2020 = vsel %vm361, %v1970, 0.0
        %v2021 = vsel %vm361, %v1971, 0.0
        %v2022 = vadd.f32 %v2020, %v2021
        %v2023 = vsel %vm361, %v1972, 0.0
        %v2024 = vadd.f32 %v2022, %v2023
        %v2025 = vsel %vm361, %v1973, 0.0
        %v2026 = vadd.f32 %v2024, %v2025
        %v2027 = vsel %vm361, %v1974, 0.0
        %v2028 = vadd.f32 %v2026, %v2027
        %v2029 = vrot.slane %v2028, 4
        %v2030 = vadd.f32 %v2028, %v2029
        %v2031 = vrot.slane %v2030, 2
        %v2032 = vadd.f32 %v2030, %v2031
        %v2033 = vrot.slane %v2032, 1
        %v2034 = vadd.f32 %v2032, %v2033
        %v2035 = vsel %vm361, %v1975, 0.0
        %v2036 = vsel %vm361, %v1976, 0.0
        %v2037 = vadd.f32 %v2035, %v2036
        %v2038 = vsel %vm361, %v1977, 0.0
        %v2039 = vadd.f32 %v2037, %v2038
        %v2040 = vsel %vm361, %v1978, 0.0
        %v2041 = vadd.f32 %v2039, %v2040
        %v2042 = vsel %vm361, %v1979, 0.0
        %v2043 = vadd.f32 %v2041, %v2042
        %v2044 = vrot.slane %v2043, 4
        %v2045 = vadd.f32 %v2043, %v2044
        %v2046 = vrot.slane %v2045, 2
        %v2047 = vadd.f32 %v2045, %v2046
        %v2048 = vrot.slane %v2047, 1
        %v2049 = vadd.f32 %v2047, %v2048
        %v2050 = vsel %vm361, %v1980, 0.0
        %v2051 = vsel %vm361, %v1981, 0.0
        %v2052 = vadd.f32 %v2050, %v2051
        %v2053 = vsel %vm361, %v1982, 0.0
        %v2054 = vadd.f32 %v2052, %v2053
        %v2055 = vsel %vm361, %v1983, 0.0
        %v2056 = vadd.f32 %v2054, %v2055
        %v2057 = vsel %vm361, %v1984, 0.0
        %v2058 = vadd.f32 %v2056, %v2057
        %v2059 = vrot.slane %v2058, 4
        %v2060 = vadd.f32 %v2058, %v2059
        %v2061 = vrot.slane %v2060, 2
        %v2062 = vadd.f32 %v2060, %v2061
        %v2063 = vrot.slane %v2062, 1
        %v2064 = vadd.f32 %v2062, %v2063
        %v2065 = vsel %vm361, %v1985, 0.0
        %v2066 = vsel %vm361, %v1986, 0.0
        %v2067 = vadd.f32 %v2065, %v2066
        %v2068 = vsel %vm361, %v1987, 0.0
        %v2069 = vadd.f32 %v2067, %v2068
        %v2070 = vsel %vm361, %v1988, 0.0
        %v2071 = vadd.f32 %v2069, %v2070
        %v2072 = vsel %vm361, %v1989, 0.0
        %v2073 = vadd.f32 %v2071, %v2072
        %v2074 = vrot.slane %v2073, 4
        %v2075 = vadd.f32 %v2073, %v2074
        %v2076 = vrot.slane %v2075, 2
        %v2077 = vadd.f32 %v2075, %v2076
        %v2078 = vrot.slane %v2077, 1
        %v2079 = vadd.f32 %v2077, %v2078
        %v2080 = vsel %vm361, %v1990, 0.0
        %v2081 = vsel %vm361, %v1991, 0.0
        %v2082 = vadd.f32 %v2080, %v2081
        %v2083 = vsel %vm361, %v1992, 0.0
        %v2084 = vadd.f32 %v2082, %v2083
        %v2085 = vsel %vm361, %v1993, 0.0
        %v2086 = vadd.f32 %v2084, %v2085
        %v2087 = vsel %vm361, %v1994, 0.0
        %v2088 = vadd.f32 %v2086, %v2087
        %v2089 = vrot.slane %v2088, 4
        %v2090 = vadd.f32 %v2088, %v2089
        %v2091 = vrot.slane %v2090, 2
        %v2092 = vadd.f32 %v2090, %v2091
        %v2093 = vrot.slane %v2092, 1
        %v2094 = vadd.f32 %v2092, %v2093
        %v2095 = vsel %vm361, %v1995, 0.0
        %v2096 = vsel %vm361, %v1996, 0.0
        %v2097 = vadd.f32 %v2095, %v2096
        %v2098 = vsel %vm361, %v1997, 0.0
        %v2099 = vadd.f32 %v2097, %v2098
        %v2100 = vsel %vm361, %v1998, 0.0
        %v2101 = vadd.f32 %v2099, %v2100
        %v2102 = vsel %vm361, %v1999, 0.0
        %v2103 = vadd.f32 %v2101, %v2102
        %v2104 = vrot.slane %v2103, 4
        %v2105 = vadd.f32 %v2103, %v2104
        %v2106 = vrot.slane %v2105, 2
        %v2107 = vadd.f32 %v2105, %v2106
        %v2108 = vrot.slane %v2107, 1
        %v2109 = vadd.f32 %v2107, %v2108
        %v2110 = vsel %vm361, %v2000, 0.0
        %v2111 = vsel %vm361, %v2001, 0.0
        %v2112 = vadd.f32 %v2110, %v2111
        %v2113 = vsel %vm361, %v2002, 0.0
        %v2114 = vadd.f32 %v2112, %v2113
        %v2115 = vsel %vm361, %v2003, 0.0
        %v2116 = vadd.f32 %v2114, %v2115
        %v2117 = vsel %vm361, %v2004, 0.0
        %v2118 = vadd.f32 %v2116, %v2117
        %v2119 = vrot.slane %v2118, 4
        %v2120 = vadd.f32 %v2118, %v2119
        %v2121 = vrot.slane %v2120, 2
        %v2122 = vadd.f32 %v2120, %v2121
        %v2123 = vrot.slane %v2122, 1
        %v2124 = vadd.f32 %v2122, %v2123
        %v2133 = vsel %vm1308, %v2034, %v2019
        %v2134 = vsel %vm1310, %v2049, %v2133
        %v2135 = vsel %vm1312, %v2064, %v2134
        %v2136 = vsel %vm1314, %v2079, %v2135
        %v2137 = vsel %vm1316, %v2094, %v2136
        %v2138 = vsel %vm1318, %v2109, %v2137
        %v2139 = vsel %vm1320, %v2124, %v2138
        %2141 = vst.msk [vmem:[%s267] sm:$0xff] %vm361, %v2139
        %s2142 = sand.u32 %s145, 1
        %s2143 = scalar_lea.sflag [#allocation4], %s2142
        %s2144 = sand.u32 %s145, 1
        %s2145 = smul.addr %s2144, 8
        %s2146 = scalar_lea.vmem [#allocation5], %s2145
        // Predicated region
        $region45: #{tpu_custom_call.1} parent=39 // pred_check
          %p2147 = pneg %p155
        $region46: #{tpu_custom_call.1} parent=39 // pred_check_branch
          %2149 = sbr.rel (%p2147) target = $region48
        $region47: #{tpu_custom_call.1} parent=39 // pred_region
          %2151 = vsyncadd %s2143, 0
          %s2152 = smul.addr %s22, 8
          %s2153 = scalar_lea.hbm %s5, %s2152
          %s2155 = sshll.u32 %s2146, 4
          %s2156 = int_to_ptr.vmem [resolvable:$true] %s2155
          %s2157 = sshll.u32 %s2153, 4
          %s2158 = int_to_ptr.hbm [resolvable:$true] %s2157
          %2160 = dma.vmem_to_hbm [thread:$0]  %s2156, 128, %s2158, %s2143
        $region48: #{tpu_custom_call.1} parent=39 // pred_fallthru
          _
      $region40: #{tpu_custom_call.1} parent=5 // pred_fallthru
        _
      %p2161 = scmp.le.s32.totalorder 2, %s17
      // Predicated region
      $region49: #{tpu_custom_call.1} parent=5 // pred_check
        %p2162 = pneg %p2161
      $region50: #{tpu_custom_call.1} parent=5 // pred_check_branch
        %2164 = sbr.rel (%p2162) target = $region52
      $region51: #{tpu_custom_call.1} parent=5 // pred_region
        %s2165 = ssub.s32 %s17, 2
        // Predicated region
        $region53: #{tpu_custom_call.1} parent=51 // pred_check
          %p2166 = pneg %p161
        $region54: #{tpu_custom_call.1} parent=51 // pred_check_branch
          %2168 = sbr.rel (%p2166) target = $region56
        $region55: #{tpu_custom_call.1} parent=51 // pred_region
          %s2169 = sand.u32 %s146, 1
          %s2170 = scalar_lea.sflag [#allocation4], %s2169
          %s2171 = sand.u32 %s146, 1
          %s2172 = smul.addr %s2171, 8
          %s2173 = scalar_lea.vmem [#allocation5], %s2172
          %2175 = dma.done %s2170, 128
        $region56: #{tpu_custom_call.1} parent=51 // pred_fallthru
          _
      $region52: #{tpu_custom_call.1} parent=5 // pred_fallthru
        _
    $region6: #{tpu_custom_call.1} parent=1 // loop_footer
      %s21 = sadd.s32 1, %s17
    $region7: #{tpu_custom_call.1} parent=1 // loop_footer_branch
      %16 = sbr.rel target = $region3
    $region8: #{tpu_custom_call.1} parent=1 // loop_exit
      _
    %2176 = vsyncpa [#allocation3], 1
    %s2177 = scalar_lea.sflag [#allocation3], 1
    %2178 = vsyncpa %s2177, 1
    %2179 = vsyncpa [#allocation4], 1
    %s2180 = scalar_lea.sflag [#allocation4], 1
    %2181 = vsyncpa %s2180, 1

</llo_original>
